<compile_context>
chip_gen: v6e
topology: v6e:2x2x1
jax: 0.10.0
libtpu: 0.0.40
codegen_flags: <defaults>
</compile_context>

<pallas_src>
import functools
import math

import jax
import jax.numpy as jnp
import numpy as np
from jax import lax
from jax.experimental import pallas as pl
from jax.experimental.pallas import tpu as pltpu


# ----------------------------- Pallas kernels ------------------------------

def _matmul_kernel(x_ref, w_ref, o_ref):
    # x: (tm, K) bf16, w: (K, N) bf16 -> o: (tm, N) f32
    o_ref[...] = jnp.dot(
        x_ref[...], w_ref[...], preferred_element_type=jnp.float32
    ).astype(o_ref.dtype)


def matmul_pallas(x, w, out_dtype=jnp.float32, block_m=256):
    """x: (M, K) @ w: (K, N) -> (M, N). M tiled (parallel), K/N kept whole."""
    M, K = x.shape
    Kw, N = w.shape
    assert K == Kw
    tm = M if M <= block_m else block_m
    assert M % tm == 0, "demo path assumes M divisible by the M-tile"
    return pl.pallas_call(
        _matmul_kernel,
        out_shape=jax.ShapeDtypeStruct((M, N), out_dtype),
        grid=(M // tm,),
        in_specs=[
            pl.BlockSpec((tm, K), lambda i: (i, 0)),
            pl.BlockSpec((K, N), lambda i: (0, 0)),
        ],
        out_specs=pl.BlockSpec((tm, N), lambda i: (i, 0)),
        compiler_params=pltpu.CompilerParams(
            dimension_semantics=("parallel",)
        ),
    )(x, w)


def _attn_oproj_kernel(q_ref, k_ref, v_ref, wo_ref, o_ref, *,
                       n_head, head_dim, scale):
    # q/k/v: (1, T, H*D) bf16 (K/V zero-padded per head to D).
    # wo: (H, D, C) bf16.  o: (1, T, C) f32, lane-dense (C = 192).
    T = q_ref.shape[1]
    c_out = o_ref.shape[2]
    row = lax.broadcasted_iota(jnp.int32, (T, T), 0)
    col = lax.broadcasted_iota(jnp.int32, (T, T), 1)
    causal = col <= row

    acc = jnp.zeros((T, c_out), jnp.float32)
    for h in range(n_head):                      # static unroll over heads
        sl = slice(h * head_dim, (h + 1) * head_dim)
        q = q_ref[0, :, sl] * scale              # (T, D) bf16, scale Q not scores
        k = k_ref[0, :, sl]                      # (T, D) bf16
        v = v_ref[0, :, sl]                      # (T, D) bf16

        s = jnp.dot(q, k.T, preferred_element_type=jnp.float32)   # (T, T) f32
        s = jnp.where(causal, s, -1e30)
        m = jnp.max(s, axis=-1, keepdims=True)
        p = jnp.exp(s - m)
        l = jnp.sum(p, axis=-1, keepdims=True)
        p = p * pl.reciprocal(l, approx=True)    # EUP slot, frees VALU

        y = jnp.dot(p.astype(v.dtype), v,
                    preferred_element_type=jnp.float32)            # (T, D) f32
        acc = acc + jnp.dot(y.astype(wo_ref.dtype), wo_ref[h],
                            preferred_element_type=jnp.float32)    # (T, C) f32
    o_ref[0] = acc.astype(o_ref.dtype)


def attention_oproj_pallas(q, k, v, wo_heads, n_head, head_dim, scale):
    B, T, C = q.shape
    H, Dh, Cout = wo_heads.shape
    kernel = functools.partial(
        _attn_oproj_kernel, n_head=n_head, head_dim=head_dim, scale=scale)
    return pl.pallas_call(
        kernel,
        out_shape=jax.ShapeDtypeStruct((B, T, Cout), jnp.float32),
        grid=(B,),
        in_specs=[
            pl.BlockSpec((1, T, C), lambda b: (b, 0, 0)),
            pl.BlockSpec((1, T, C), lambda b: (b, 0, 0)),
            pl.BlockSpec((1, T, C), lambda b: (b, 0, 0)),
            pl.BlockSpec((H, Dh, Cout), lambda b: (0, 0, 0)),
        ],
        out_specs=pl.BlockSpec((1, T, Cout), lambda b: (b, 0, 0)),
        compiler_params=pltpu.CompilerParams(
            dimension_semantics=("parallel",)
        ),
    )(q, k, v, wo_heads)


# ------------------------------- RoPE (glue) --------------------------------

def _rope_tables(T, kvd, base=10000.0):
    inv_freq = 1.0 / (base ** (jnp.arange(0, kvd, 2, dtype=jnp.float32) / kvd))
    t = jnp.arange(T, dtype=jnp.float32)
    freqs = jnp.einsum("i,j->ij", t, inv_freq)               # (T, ceil(kvd/2))
    emb = jnp.concatenate([freqs, freqs], axis=-1)           # (T, 2*ceil(kvd/2))
    return jnp.cos(emb)[:, :kvd], jnp.sin(emb)[:, :kvd]      # (T, kvd) each


def _rotate_half(x):
    half = x.shape[-1] // 2
    return jnp.concatenate([-x[..., half:], x[..., :half]], axis=-1)


def apply_rope_packed(qp, kp, n_head, head_dim, kv_dim_per_head, base=10000.0):
    """qp/kp: (B, T, H*Dh) packed per head; K pad lanes (index >= kvd) are zero."""
    B, T, _ = qp.shape
    H, Dh, kvd = n_head, head_dim, kv_dim_per_head
    cos, sin = _rope_tables(T, kvd, base)
    cos = cos[None, :, None, :]                              # (1, T, 1, kvd)
    sin = sin[None, :, None, :]
    q4 = qp.reshape(B, T, H, Dh)
    k4 = kp.reshape(B, T, H, Dh)
    q_part = q4[..., :kvd]
    k_part = k4[..., :kvd]
    q_rot = jnp.concatenate(
        [q_part * cos + _rotate_half(q_part) * sin, q4[..., kvd:]], axis=-1)
    k_rot = jnp.concatenate(
        [k_part * cos + _rotate_half(k_part) * sin, k4[..., kvd:]], axis=-1)
    return q_rot.reshape(B, T, H * Dh), k_rot.reshape(B, T, H * Dh)


# ------------------------- Weight prep (hoisted, once) ------------------------

def prepare_params(wq, wk, wv, wo, n_head, head_dim, kv_dim_per_head):
    """PyTorch Linear weights (out, in) -> fused/padded bf16 kernel operands."""
    C = wq.shape[1]
    H, Dh, kvd = n_head, head_dim, kv_dim_per_head

    def pad_heads(w):                                        # (H*kvd, C) -> (C, H*Dh)
        wT = w.T.reshape(C, H, kvd)
        wT = jnp.pad(wT, ((0, 0), (0, 0), (0, Dh - kvd)))
        return wT.reshape(C, H * Dh)

    w_qkv = jnp.concatenate([wq.T, pad_heads(wk), pad_heads(wv)], axis=1)  # (C, 3C)
    wo_heads = wo.T.reshape(H, Dh, C)                                      # (H, Dh, C)
    return w_qkv.astype(jnp.bfloat16), wo_heads.astype(jnp.bfloat16)


# --------------------------- Forward (Pallas path) ---------------------------

@functools.partial(jax.jit,
                   static_argnames=("n_head", "head_dim", "kv_dim_per_head"))
def causal_self_attention(x, w_qkv, wo_heads, *,
                          n_head, head_dim, kv_dim_per_head):
    B, T, C = x.shape
    H, Dh = n_head, head_dim

    # Fused QKV projection (one lane-dense matmul instead of three).
    x2 = x.reshape(B * T, C).astype(jnp.bfloat16)
    qkv = matmul_pallas(x2, w_qkv).reshape(B, T, 3 * C)      # f32
    q = qkv[..., 0:C]                                        # (B, T, H*Dh)
    k = qkv[..., C:2 * C]                                    # per-head padded to Dh
    v = qkv[..., 2 * C:3 * C]                                # per-head padded to Dh

    # RoPE on the 63 real dims per head (pad lane of K stays exactly zero).
    q, k = apply_rope_packed(q, k, H, Dh, kv_dim_per_head)

    scale = 1.0 / math.sqrt(Dh)                              # SDPA default
    y = attention_oproj_pallas(q.astype(jnp.bfloat16),
                               k.astype(jnp.bfloat16),
                               v.astype(jnp.bfloat16),
                               wo_heads, H, Dh, scale)       # (B, T, C) f32
    return y


# ------------------------------ Pure-JAX reference ---------------------------

def causal_self_attention_ref(params, x, n_head, head_dim, kv_dim_per_head):
    wq, wk, wv, wo = params
    B, T, C = x.shape
    kvd = kv_dim_per_head
    q = (x @ wq.T).reshape(B, T, n_head, head_dim).transpose(0, 2, 1, 3)
    k = (x @ wk.T).reshape(B, T, n_head, kvd).transpose(0, 2, 1, 3)
    v = (x @ wv.T).reshape(B, T, n_head, kvd).transpose(0, 2, 1, 3)
    cos, sin = _rope_tables(T, kvd)
    cos = cos[None, None]
    sin = sin[None, None]
    k = k * cos + _rotate_half(k) * sin
    q_part = q[..., :kvd]
    q = jnp.concatenate([q_part * cos + _rotate_half(q_part) * sin,
                         q[..., kvd:]], axis=-1)
    pad = head_dim - kvd
    zpad = jnp.zeros((B, n_head, T, pad), dtype=jnp.float32)
    k_pad = jnp.concatenate([k, zpad], axis=-1)
    v_pad = jnp.concatenate([v, zpad], axis=-1)
    scale = 1.0 / math.sqrt(head_dim)
    s = jnp.einsum("bhqd,bhkd->bhqk", q, k_pad) * scale
    mask = jnp.tril(jnp.ones((T, T), dtype=bool))
    s = jnp.where(mask[None, None], s, -1e30)
    p = jax.nn.softmax(s, axis=-1)
    y = jnp.einsum("bhqk,bhkd->bhqd", p, v_pad)
    y = y.transpose(0, 2, 1, 3).reshape(B, T, C)
    return y @ wo.T


# ----------------------------------- main ------------------------------------

if __name__ == "__main__":
    # Config: n_head divides both n_embd and kv_dim=189; kv_dim_per_head <= head_dim.
    B, T = 2, 8
    n_head = 3
    n_embd = 192
    head_dim = n_embd // n_head          # 64
    kv_dim = 189
    kv_dim_per_head = kv_dim // n_head   # 63

    key = jax.random.PRNGKey(0)
    kx, kq, kk, kv_, ko = jax.random.split(key, 5)
    x = jax.random.normal(kx, (B, T, n_embd), dtype=jnp.float32)
    # PyTorch nn.Linear weight layout: (out_features, in_features); bias=False.
    wq = 0.02 * jax.random.normal(kq, (n_embd, n_embd), dtype=jnp.float32)
    wk = 0.02 * jax.random.normal(kk, (kv_dim, n_embd), dtype=jnp.float32)
    wv = 0.02 * jax.random.normal(kv_, (kv_dim, n_embd), dtype=jnp.float32)
    wo = 0.02 * jax.random.normal(ko, (n_embd, n_embd), dtype=jnp.float32)

    # One-time hoist: transposes, per-head zero-padding, head-split of wo, bf16 cast.
    w_qkv, wo_heads = prepare_params(wq, wk, wv, wo,
                                     n_head, head_dim, kv_dim_per_head)

    y = causal_self_attention(x, w_qkv, wo_heads,
                              n_head=n_head, head_dim=head_dim,
                              kv_dim_per_head=kv_dim_per_head)
    y = jax.block_until_ready(y)

    y_ref = causal_self_attention_ref((wq, wk, wv, wo), x,
                                      n_head, head_dim, kv_dim_per_head)
    y_ref = jax.block_until_ready(y_ref)

    assert y.shape == (B, T, n_embd)
    np.testing.assert_allclose(np.asarray(y), np.asarray(y_ref),
                               rtol=2e-2, atol=2e-2)
    print("KERNEL_OK")
</pallas_src>

<mosaic_0001>
module attributes {stable_mosaic.version = 11 : i64} {
  func.func @_matmul_kernel(%arg0: i32, %arg1: memref<16x192xbf16, #tpu.memory_space<vmem>>, %arg2: memref<192x576xbf16, #tpu.memory_space<vmem>>, %arg3: memref<16x576xf32, #tpu.memory_space<vmem>>) attributes {dimension_semantics = [#tpu.dimension_semantics<parallel>], iteration_bounds = array<i64: 1>, scalar_prefetch = 0 : i64, scratch_operands = 0 : i64, tpu.core_type = #tpu.core_type<tc>, window_params = [{transform_indices = @transform_0, window_bounds = array<i64: 16, 192>}, {pipeline_mode = #tpu.pipeline_mode<synchronous>, transform_indices = @transform_1, window_bounds = array<i64: 192, 576>}, {transform_indices = @transform_2, window_bounds = array<i64: 16, 576>}]} {
    %c0 = arith.constant 0 : index
    %c0_0 = arith.constant 0 : index
    %0 = vector.load %arg1[%c0, %c0_0] : memref<16x192xbf16, #tpu.memory_space<vmem>>, vector<16x192xbf16>
    %c0_1 = arith.constant 0 : index
    %c0_2 = arith.constant 0 : index
    %1 = vector.load %arg2[%c0_1, %c0_2] : memref<192x576xbf16, #tpu.memory_space<vmem>>, vector<192x576xbf16>
    %cst = arith.constant dense<0.000000e+00> : vector<16x576xf32>
    %2 = tpu.matmul %0, %1, %cst {dimension_numbers = #tpu.dot_dimension_numbers<[1], [0], [0], [1], [0, 0, 1, 1], [], []>} : vector<16x192xbf16>, vector<192x576xbf16>, vector<16x576xf32> -> vector<16x576xf32>
    %c0_3 = arith.constant 0 : index
    %c0_4 = arith.constant 0 : index
    %3 = vector.load %arg3[%c0_3, %c0_4] : memref<16x576xf32, #tpu.memory_space<vmem>>, vector<16x576xf32>
    tpu.vector_store %arg3[%c0_3, %c0_4], %2 {strides = array<i32>} : memref<16x576xf32, #tpu.memory_space<vmem>>, vector<16x576xf32>,
    return
  }
  func.func @transform_0(%arg0: i32) -> (i32, i32) {
    %c0_i32 = arith.constant 0 : i32
    %c0_i32_0 = arith.constant 0 : i32
    return %arg0, %c0_i32 : i32, i32
  }
  func.func @transform_1(%arg0: i32) -> (i32, i32) {
    %c0_i32 = arith.constant 0 : i32
    %c0_i32_0 = arith.constant 0 : i32
    %c0_i32_1 = arith.constant 0 : i32
    return %c0_i32, %c0_i32_0 : i32, i32
  }
  func.func @transform_2(%arg0: i32) -> (i32, i32) {
    %c0_i32 = arith.constant 0 : i32
    %c0_i32_0 = arith.constant 0 : i32
    return %arg0, %c0_i32 : i32, i32
  }
}

module attributes {stable_mosaic.version = 11 : i64} {
  func.func @_attn_oproj_kernel(%arg0: i32, %arg1: memref<1x8x192xbf16, #tpu.memory_space<vmem>>, %arg2: memref<1x8x192xbf16, #tpu.memory_space<vmem>>, %arg3: memref<1x8x192xbf16, #tpu.memory_space<vmem>>, %arg4: memref<3x64x192xbf16, #tpu.memory_space<vmem>>, %arg5: memref<1x8x192xf32, #tpu.memory_space<vmem>>) attributes {dimension_semantics = [#tpu.dimension_semantics<parallel>], iteration_bounds = array<i64: 2>, scalar_prefetch = 0 : i64, scratch_operands = 0 : i64, tpu.core_type = #tpu.core_type<tc>, window_params = [{transform_indices = @transform_0, window_bounds = array<i64: 1, 8, 192>}, {transform_indices = @transform_1, window_bounds = array<i64: 1, 8, 192>}, {transform_indices = @transform_2, window_bounds = array<i64: 1, 8, 192>}, {pipeline_mode = #tpu.pipeline_mode<synchronous>, transform_indices = @transform_3, window_bounds = array<i64: 3, 64, 192>}, {transform_indices = @transform_4, window_bounds = array<i64: 1, 8, 192>}]} {
    %0 = tpu.iota {dimensions = array<i32: 0>} : vector<8x8xi32>
    %1 = tpu.iota {dimensions = array<i32: 1>} : vector<8x8xi32>
    %2 = arith.cmpi sle, %1, %0 : vector<8x8xi32>
    %cst = arith.constant 0.000000e+00 : f32
    %3 = vector.broadcast %cst : f32 to vector<8x192xf32>
    %c0 = arith.constant 0 : index
    %c0_0 = arith.constant 0 : index
    %c0_1 = arith.constant 0 : index
    %4 = vector.load %arg1[%c0, %c0_0, %c0_1] : memref<1x8x192xbf16, #tpu.memory_space<vmem>>, vector<1x8x64xbf16>
    %5 = vector.shape_cast %4 : vector<1x8x64xbf16> to vector<8x64xbf16>
    %cst_2 = arith.constant 1.250000e-01 : bf16
    %6 = vector.broadcast %cst_2 : bf16 to vector<8x64xbf16>
    %7 = arith.mulf %5, %6 : vector<8x64xbf16>
    %c0_3 = arith.constant 0 : index
    %c0_4 = arith.constant 0 : index
    %c0_5 = arith.constant 0 : index
    %8 = vector.load %arg2[%c0_3, %c0_4, %c0_5] : memref<1x8x192xbf16, #tpu.memory_space<vmem>>, vector<1x8x64xbf16>
    %9 = vector.shape_cast %8 : vector<1x8x64xbf16> to vector<8x64xbf16>
    %c0_6 = arith.constant 0 : index
    %c0_7 = arith.constant 0 : index
    %c0_8 = arith.constant 0 : index
    %10 = vector.load %arg3[%c0_6, %c0_7, %c0_8] : memref<1x8x192xbf16, #tpu.memory_space<vmem>>, vector<1x8x64xbf16>
    %11 = vector.shape_cast %10 : vector<1x8x64xbf16> to vector<8x64xbf16>
    %12 = tpu.transpose %9, [1, 0] : vector<8x64xbf16> -> vector<64x8xbf16>
    %cst_9 = arith.constant dense<0.000000e+00> : vector<8x8xf32>
    %13 = tpu.matmul %7, %12, %cst_9 {dimension_numbers = #tpu.dot_dimension_numbers<[1], [0], [0], [1], [0, 0, 1, 1], [], []>} : vector<8x64xbf16>, vector<64x8xbf16>, vector<8x8xf32> -> vector<8x8xf32>
    %cst_10 = arith.constant -1.000000e+30 : f32
    %14 = vector.broadcast %cst_10 : f32 to vector<8x8xf32>
    %15 = arith.select %2, %13, %14 : vector<8x8xi1>, vector<8x8xf32>
    %cst_11 = arith.constant dense<0xFF800000> : vector<8xf32>
    %16 = vector.multi_reduction <maximumf>, %15, %cst_11 [1] : vector<8x8xf32> to vector<8xf32>
    %17 = vector.shape_cast %16 : vector<8xf32> to vector<8x1xf32>
    %18 = vector.broadcast %17 : vector<8x1xf32> to vector<8x8xf32>
    %19 = arith.subf %15, %18 : vector<8x8xf32>
    %20 = math.exp %19 : vector<8x8xf32>
    %cst_12 = arith.constant dense<0.000000e+00> : vector<8xf32>
    %21 = vector.multi_reduction <add>, %20, %cst_12 [1] : vector<8x8xf32> to vector<8xf32>
    %22 = vector.shape_cast %21 : vector<8xf32> to vector<8x1xf32>
    %23 = tpu.reciprocal %22 {approx = true} : vector<8x1xf32> -> vector<8x1xf32>
    %24 = vector.broadcast %23 : vector<8x1xf32> to vector<8x8xf32>
    %25 = arith.mulf %20, %24 : vector<8x8xf32>
    %26 = arith.truncf %25 : vector<8x8xf32> to vector<8x8xbf16>
    %cst_13 = arith.constant dense<0.000000e+00> : vector<8x64xf32>
    %27 = tpu.matmul %26, %11, %cst_13 {dimension_numbers = #tpu.dot_dimension_numbers<[1], [0], [0], [1], [0, 0, 1, 1], [], []>} : vector<8x8xbf16>, vector<8x64xbf16>, vector<8x64xf32> -> vector<8x64xf32>
    %28 = arith.truncf %27 : vector<8x64xf32> to vector<8x64xbf16>
    %c0_14 = arith.constant 0 : index
    %c0_15 = arith.constant 0 : index
    %c0_16 = arith.constant 0 : index
    %29 = vector.load %arg4[%c0_14, %c0_15, %c0_16] : memref<3x64x192xbf16, #tpu.memory_space<vmem>>, vector<1x64x192xbf16>
    %30 = vector.shape_cast %29 : vector<1x64x192xbf16> to vector<64x192xbf16>
    %cst_17 = arith.constant dense<0.000000e+00> : vector<8x192xf32>
    %31 = tpu.matmul %28, %30, %cst_17 {dimension_numbers = #tpu.dot_dimension_numbers<[1], [0], [0], [1], [0, 0, 1, 1], [], []>} : vector<8x64xbf16>, vector<64x192xbf16>, vector<8x192xf32> -> vector<8x192xf32>
    %32 = arith.addf %3, %31 : vector<8x192xf32>
    %c0_18 = arith.constant 0 : index
    %c0_19 = arith.constant 0 : index
    %c64 = arith.constant 64 : index
    %33 = vector.load %arg1[%c0_18, %c0_19, %c64] : memref<1x8x192xbf16, #tpu.memory_space<vmem>>, vector<1x8x64xbf16>
    %34 = vector.shape_cast %33 : vector<1x8x64xbf16> to vector<8x64xbf16>
    %cst_20 = arith.constant 1.250000e-01 : bf16
    %35 = vector.broadcast %cst_20 : bf16 to vector<8x64xbf16>
    %36 = arith.mulf %34, %35 : vector<8x64xbf16>
    %c0_21 = arith.constant 0 : index
    %c0_22 = arith.constant 0 : index
    %c64_23 = arith.constant 64 : index
    %37 = vector.load %arg2[%c0_21, %c0_22, %c64_23] : memref<1x8x192xbf16, #tpu.memory_space<vmem>>, vector<1x8x64xbf16>
    %38 = vector.shape_cast %37 : vector<1x8x64xbf16> to vector<8x64xbf16>
    %c0_24 = arith.constant 0 : index
    %c0_25 = arith.constant 0 : index
    %c64_26 = arith.constant 64 : index
    %39 = vector.load %arg3[%c0_24, %c0_25, %c64_26] : memref<1x8x192xbf16, #tpu.memory_space<vmem>>, vector<1x8x64xbf16>
    %40 = vector.shape_cast %39 : vector<1x8x64xbf16> to vector<8x64xbf16>
    %41 = tpu.transpose %38, [1, 0] : vector<8x64xbf16> -> vector<64x8xbf16>
    %cst_27 = arith.constant dense<0.000000e+00> : vector<8x8xf32>
    %42 = tpu.matmul %36, %41, %cst_27 {dimension_numbers = #tpu.dot_dimension_numbers<[1], [0], [0], [1], [0, 0, 1, 1], [], []>} : vector<8x64xbf16>, vector<64x8xbf16>, vector<8x8xf32> -> vector<8x8xf32>
    %cst_28 = arith.constant -1.000000e+30 : f32
    %43 = vector.broadcast %cst_28 : f32 to vector<8x8xf32>
    %44 = arith.select %2, %42, %43 : vector<8x8xi1>, vector<8x8xf32>
    %cst_29 = arith.constant dense<0xFF800000> : vector<8xf32>
    %45 = vector.multi_reduction <maximumf>, %44, %cst_29 [1] : vector<8x8xf32> to vector<8xf32>
    %46 = vector.shape_cast %45 : vector<8xf32> to vector<8x1xf32>
    %47 = vector.broadcast %46 : vector<8x1xf32> to vector<8x8xf32>
    %48 = arith.subf %44, %47 : vector<8x8xf32>
    %49 = math.exp %48 : vector<8x8xf32>
    %cst_30 = arith.constant dense<0.000000e+00> : vector<8xf32>
    %50 = vector.multi_reduction <add>, %49, %cst_30 [1] : vector<8x8xf32> to vector<8xf32>
    %51 = vector.shape_cast %50 : vector<8xf32> to vector<8x1xf32>
    %52 = tpu.reciprocal %51 {approx = true} : vector<8x1xf32> -> vector<8x1xf32>
    %53 = vector.broadcast %52 : vector<8x1xf32> to vector<8x8xf32>
    %54 = arith.mulf %49, %53 : vector<8x8xf32>
    %55 = arith.truncf %54 : vector<8x8xf32> to vector<8x8xbf16>
    %cst_31 = arith.constant dense<0.000000e+00> : vector<8x64xf32>
    %56 = tpu.matmul %55, %40, %cst_31 {dimension_numbers = #tpu.dot_dimension_numbers<[1], [0], [0], [1], [0, 0, 1, 1], [], []>} : vector<8x8xbf16>, vector<8x64xbf16>, vector<8x64xf32> -> vector<8x64xf32>
    %57 = arith.truncf %56 : vector<8x64xf32> to vector<8x64xbf16>
    %c1 = arith.constant 1 : index
    %c0_32 = arith.constant 0 : index
    %c0_33 = arith.constant 0 : index
    %58 = vector.load %arg4[%c1, %c0_32, %c0_33] : memref<3x64x192xbf16, #tpu.memory_space<vmem>>, vector<1x64x192xbf16>
    %59 = vector.shape_cast %58 : vector<1x64x192xbf16> to vector<64x192xbf16>
    %cst_34 = arith.constant dense<0.000000e+00> : vector<8x192xf32>
    %60 = tpu.matmul %57, %59, %cst_34 {dimension_numbers = #tpu.dot_dimension_numbers<[1], [0], [0], [1], [0, 0, 1, 1], [], []>} : vector<8x64xbf16>, vector<64x192xbf16>, vector<8x192xf32> -> vector<8x192xf32>
    %61 = arith.addf %32, %60 : vector<8x192xf32>
    %c0_35 = arith.constant 0 : index
    %c0_36 = arith.constant 0 : index
    %c128 = arith.constant 128 : index
    %62 = vector.load %arg1[%c0_35, %c0_36, %c128] : memref<1x8x192xbf16, #tpu.memory_space<vmem>>, vector<1x8x64xbf16>
    %63 = vector.shape_cast %62 : vector<1x8x64xbf16> to vector<8x64xbf16>
    %cst_37 = arith.constant 1.250000e-01 : bf16
    %64 = vector.broadcast %cst_37 : bf16 to vector<8x64xbf16>
    %65 = arith.mulf %63, %64 : vector<8x64xbf16>
    %c0_38 = arith.constant 0 : index
    %c0_39 = arith.constant 0 : index
    %c128_40 = arith.constant 128 : index
    %66 = vector.load %arg2[%c0_38, %c0_39, %c128_40] : memref<1x8x192xbf16, #tpu.memory_space<vmem>>, vector<1x8x64xbf16>
    %67 = vector.shape_cast %66 : vector<1x8x64xbf16> to vector<8x64xbf16>
    %c0_41 = arith.constant 0 : index
    %c0_42 = arith.constant 0 : index
    %c128_43 = arith.constant 128 : index
    %68 = vector.load %arg3[%c0_41, %c0_42, %c128_43] : memref<1x8x192xbf16, #tpu.memory_space<vmem>>, vector<1x8x64xbf16>
    %69 = vector.shape_cast %68 : vector<1x8x64xbf16> to vector<8x64xbf16>
    %70 = tpu.transpose %67, [1, 0] : vector<8x64xbf16> -> vector<64x8xbf16>
    %cst_44 = arith.constant dense<0.000000e+00> : vector<8x8xf32>
    %71 = tpu.matmul %65, %70, %cst_44 {dimension_numbers = #tpu.dot_dimension_numbers<[1], [0], [0], [1], [0, 0, 1, 1], [], []>} : vector<8x64xbf16>, vector<64x8xbf16>, vector<8x8xf32> -> vector<8x8xf32>
    %cst_45 = arith.constant -1.000000e+30 : f32
    %72 = vector.broadcast %cst_45 : f32 to vector<8x8xf32>
    %73 = arith.select %2, %71, %72 : vector<8x8xi1>, vector<8x8xf32>
    %cst_46 = arith.constant dense<0xFF800000> : vector<8xf32>
    %74 = vector.multi_reduction <maximumf>, %73, %cst_46 [1] : vector<8x8xf32> to vector<8xf32>
    %75 = vector.shape_cast %74 : vector<8xf32> to vector<8x1xf32>
    %76 = vector.broadcast %75 : vector<8x1xf32> to vector<8x8xf32>
    %77 = arith.subf %73, %76 : vector<8x8xf32>
    %78 = math.exp %77 : vector<8x8xf32>
    %cst_47 = arith.constant dense<0.000000e+00> : vector<8xf32>
    %79 = vector.multi_reduction <add>, %78, %cst_47 [1] : vector<8x8xf32> to vector<8xf32>
    %80 = vector.shape_cast %79 : vector<8xf32> to vector<8x1xf32>
    %81 = tpu.reciprocal %80 {approx = true} : vector<8x1xf32> -> vector<8x1xf32>
    %82 = vector.broadcast %81 : vector<8x1xf32> to vector<8x8xf32>
    %83 = arith.mulf %78, %82 : vector<8x8xf32>
    %84 = arith.truncf %83 : vector<8x8xf32> to vector<8x8xbf16>
    %cst_48 = arith.constant dense<0.000000e+00> : vector<8x64xf32>
    %85 = tpu.matmul %84, %69, %cst_48 {dimension_numbers = #tpu.dot_dimension_numbers<[1], [0], [0], [1], [0, 0, 1, 1], [], []>} : vector<8x8xbf16>, vector<8x64xbf16>, vector<8x64xf32> -> vector<8x64xf32>
    %86 = arith.truncf %85 : vector<8x64xf32> to vector<8x64xbf16>
    %c2 = arith.constant 2 : index
    %c0_49 = arith.constant 0 : index
    %c0_50 = arith.constant 0 : index
    %87 = vector.load %arg4[%c2, %c0_49, %c0_50] : memref<3x64x192xbf16, #tpu.memory_space<vmem>>, vector<1x64x192xbf16>
    %88 = vector.shape_cast %87 : vector<1x64x192xbf16> to vector<64x192xbf16>
    %cst_51 = arith.constant dense<0.000000e+00> : vector<8x192xf32>
    %89 = tpu.matmul %86, %88, %cst_51 {dimension_numbers = #tpu.dot_dimension_numbers<[1], [0], [0], [1], [0, 0, 1, 1], [], []>} : vector<8x64xbf16>, vector<64x192xbf16>, vector<8x192xf32> -> vector<8x192xf32>
    %90 = arith.addf %61, %89 : vector<8x192xf32>
    %c0_52 = arith.constant 0 : index
    %c0_53 = arith.constant 0 : index
    %c0_54 = arith.constant 0 : index
    %91 = vector.load %arg5[%c0_52, %c0_53, %c0_54] : memref<1x8x192xf32, #tpu.memory_space<vmem>>, vector<1x8x192xf32>
    %92 = vector.shape_cast %91 : vector<1x8x192xf32> to vector<8x192xf32>
    %93 = vector.shape_cast %90 : vector<8x192xf32> to vector<1x8x192xf32>
    tpu.vector_store %arg5[%c0_52, %c0_53, %c0_54], %93 {strides = array<i32>} : memref<1x8x192xf32, #tpu.memory_space<vmem>>, vector<1x8x192xf32>,
    return
  }
  func.func @transform_0(%arg0: i32) -> (i32, i32, i32) {
    %c0_i32 = arith.constant 0 : i32
    %c0_i32_0 = arith.constant 0 : i32
    %c0_i32_1 = arith.constant 0 : i32
    return %arg0, %c0_i32, %c0_i32_0 : i32, i32, i32
  }
  func.func @transform_1(%arg0: i32) -> (i32, i32, i32) {
    %c0_i32 = arith.constant 0 : i32
    %c0_i32_0 = arith.constant 0 : i32
    %c0_i32_1 = arith.constant 0 : i32
    return %arg0, %c0_i32, %c0_i32_0 : i32, i32, i32
  }
  func.func @transform_2(%arg0: i32) -> (i32, i32, i32) {
    %c0_i32 = arith.constant 0 : i32
    %c0_i32_0 = arith.constant 0 : i32
    %c0_i32_1 = arith.constant 0 : i32
    return %arg0, %c0_i32, %c0_i32_0 : i32, i32, i32
  }
  func.func @transform_3(%arg0: i32) -> (i32, i32, i32) {
    %c0_i32 = arith.constant 0 : i32
    %c0_i32_0 = arith.constant 0 : i32
    %c0_i32_1 = arith.constant 0 : i32
    %c0_i32_2 = arith.constant 0 : i32
    return %c0_i32, %c0_i32_0, %c0_i32_1 : i32, i32, i32
  }
  func.func @transform_4(%arg0: i32) -> (i32, i32, i32) {
    %c0_i32 = arith.constant 0 : i32
    %c0_i32_0 = arith.constant 0 : i32
    %c0_i32_1 = arith.constant 0 : i32
    return %arg0, %c0_i32, %c0_i32_0 : i32, i32, i32
  }
}

</mosaic_0001>

<llo_original>
// kernel: causal_self_attention.2
$region0: #{causal_self_attention.2}
  #allocation0 [shape = 'u32[]', space=smem, size = 0x4, offset = 0x4, fixed_abs, tag = 'smem constant byte address 0x4 - core index']
  #allocation1 [shape = 'u32[144,128]{1,0:T(1,128)}', space=vmem, size = 0x12000, scoped, tag = 'internal scratch']
  %s0 = inlined_call_operand.vmem [shape: bf16[16,192], index: 0, kind: input, shape index: {}]
  %s1 = inlined_call_operand.hbm [shape: bf16[192,576], index: 1, kind: input, shape index: {}]
  %s2 = inlined_call_operand.vmem [shape: f32[16,576], index: 2, kind: output, shape index: {}]
  %s3 = sld [smem:[#allocation0]]
  $region22: #{causal_self_attention.2} parent=0
    _
  %s5 = ssub.s32 1, %s3
  %s6 = scalar_select 0, %s5, %s3
  $region1: #{causal_self_attention.2} parent=0
    #allocation2 [shape = 'u8[245760]{0}', space=vmem, size = 0x3c000, scoped, tag = 'input window, operand 1, single buffered']
    #allocation3 [shape = 's32[1]{0}', space=sflag, size = 0x4, scoped, tag = 'scoped memory for causal_self_attention.2']
    %7 = vsyncpa [#allocation3], 0
    // Predicated region
    $region2: #{causal_self_attention.2} parent=1 // pred_check
      _
    $region3: #{causal_self_attention.2} parent=1 // pred_check_branch
      %9 = sbr.rel (0) target = $region5
    $region4: #{causal_self_attention.2} parent=1 // pred_region
      _
    $region5: #{causal_self_attention.2} parent=1 // pred_fallthru
      _
    // Predicated region
    $region6: #{causal_self_attention.2} parent=1 // pred_check
      _
    $region7: #{causal_self_attention.2} parent=1 // pred_check_branch
      %11 = sbr.rel (0) target = $region9
    $region8: #{causal_self_attention.2} parent=1 // pred_region
      %s13 = ssub.s32 7680, 7680
      %14 = vsyncadd [#allocation3], %s13
      %s15 = sshll.u32 [#allocation2], 4
      %s16 = int_to_ptr.vmem [resolvable:$true] %s15
      %21 = dma.hbm_to_vmem [thread:$0]  %s1, 7680, %s16, [#allocation3], 320, 320, 20
    $region9: #{causal_self_attention.2} parent=1 // pred_fallthru
      _
    // Predicated region
    $region10: #{causal_self_attention.2} parent=1 // pred_check
      _
    $region11: #{causal_self_attention.2} parent=1 // pred_check_branch
      %23 = sbr.rel (0) target = $region13
    $region12: #{causal_self_attention.2} parent=1 // pred_region
      %24 = dma.done [#allocation3], 7680
    $region13: #{causal_self_attention.2} parent=1 // pred_fallthru
      _
    %v26 = vld [vmem:[%s0] sm:$0xff]
    %v27 = vld [vmem:[%s0 + $0x8] sm:$0xff]
    %v28 = vld [vmem:[#allocation2] sm:$0xff]
    %v29 = vld [vmem:[#allocation2 + $0x8] sm:$0xff]
    %v30 = vld [vmem:[#allocation2 + $0x10] sm:$0xf]
    %v31 = vld [vmem:[#allocation2 + $0x14] sm:$0xff]
    %v32 = vld [vmem:[#allocation2 + $0x1c] sm:$0xff]
    %v33 = vld [vmem:[#allocation2 + $0x24] sm:$0xf]
    %v34 = vld [vmem:[#allocation2 + $0x28] sm:$0xff]
    %v35 = vld [vmem:[#allocation2 + $0x30] sm:$0xff]
    %v36 = vld [vmem:[#allocation2 + $0x38] sm:$0xf]
    %v37 = vld [vmem:[#allocation2 + $0x3c] sm:$0xff]
    %v38 = vld [vmem:[#allocation2 + $0x44] sm:$0xff]
    %v39 = vld [vmem:[#allocation2 + $0x4c] sm:$0xf]
    %v40 = vld [vmem:[#allocation2 + $0x50] sm:$0xff]
    %v41 = vld [vmem:[#allocation2 + $0x58] sm:$0xff]
    %v42 = vld [vmem:[#allocation2 + $0x60] sm:$0xf]
    %v43 = vld [vmem:[#allocation2 + $0x64] sm:$0xff]
    %v44 = vld [vmem:[#allocation2 + $0x6c] sm:$0xff]
    %v45 = vld [vmem:[#allocation2 + $0x74] sm:$0xf]
    %v46 = vld [vmem:[#allocation2 + $0x78] sm:$0xff]
    %v47 = vld [vmem:[#allocation2 + $0x80] sm:$0xff]
    %v48 = vld [vmem:[#allocation2 + $0x88] sm:$0xf]
    %v49 = vld [vmem:[#allocation2 + $0x8c] sm:$0xff]
    %v50 = vld [vmem:[#allocation2 + $0x94] sm:$0xff]
    %v51 = vld [vmem:[#allocation2 + $0x9c] sm:$0xf]
    %v52 = vld [vmem:[#allocation2 + $0xa0] sm:$0xff]
    %v53 = vld [vmem:[#allocation2 + $0xa8] sm:$0xff]
    %v54 = vld [vmem:[#allocation2 + $0xb0] sm:$0xf]
    %v55 = vld [vmem:[#allocation2 + $0xb4] sm:$0xff]
    %v56 = vld [vmem:[#allocation2 + $0xbc] sm:$0xff]
    %v57 = vld [vmem:[#allocation2 + $0xc4] sm:$0xf]
    %v58 = vld [vmem:[#allocation2 + $0xc8] sm:$0xff]
    %v59 = vld [vmem:[#allocation2 + $0xd0] sm:$0xff]
    %v60 = vld [vmem:[#allocation2 + $0xd8] sm:$0xf]
    %v61 = vld [vmem:[#allocation2 + $0xdc] sm:$0xff]
    %v62 = vld [vmem:[#allocation2 + $0xe4] sm:$0xff]
    %v63 = vld [vmem:[#allocation2 + $0xec] sm:$0xf]
    %v64 = vld [vmem:[#allocation2 + $0xf0] sm:$0xff]
    %v65 = vld [vmem:[#allocation2 + $0xf8] sm:$0xff]
    %v66 = vld [vmem:[#allocation2 + $0x100] sm:$0xf]
    %v67 = vld [vmem:[#allocation2 + $0x104] sm:$0xff]
    %v68 = vld [vmem:[#allocation2 + $0x10c] sm:$0xff]
    %v69 = vld [vmem:[#allocation2 + $0x114] sm:$0xf]
    %v70 = vld [vmem:[#allocation2 + $0x118] sm:$0xff]
    %v71 = vld [vmem:[#allocation2 + $0x120] sm:$0xff]
    %v72 = vld [vmem:[#allocation2 + $0x128] sm:$0xf]
    %v73 = vld [vmem:[#allocation2 + $0x12c] sm:$0xff]
    %v74 = vld [vmem:[#allocation2 + $0x134] sm:$0xff]
    %v75 = vld [vmem:[#allocation2 + $0x13c] sm:$0xf]
    %v76 = vld [vmem:[#allocation2 + $0x140] sm:$0xff]
    %v77 = vld [vmem:[#allocation2 + $0x148] sm:$0xff]
    %v78 = vld [vmem:[#allocation2 + $0x150] sm:$0xf]
    %v79 = vld [vmem:[#allocation2 + $0x154] sm:$0xff]
    %v80 = vld [vmem:[#allocation2 + $0x15c] sm:$0xff]
    %v81 = vld [vmem:[#allocation2 + $0x164] sm:$0xf]
    %v82 = vld [vmem:[#allocation2 + $0x168] sm:$0xff]
    %v83 = vld [vmem:[#allocation2 + $0x170] sm:$0xff]
    %v84 = vld [vmem:[#allocation2 + $0x178] sm:$0xf]
    %v85 = vld [vmem:[#allocation2 + $0x17c] sm:$0xff]
    %v86 = vld [vmem:[#allocation2 + $0x184] sm:$0xff]
    %v87 = vld [vmem:[#allocation2 + $0x18c] sm:$0xf]
    %v88 = vld [vmem:[#allocation2 + $0x190] sm:$0xff]
    %v89 = vld [vmem:[#allocation2 + $0x198] sm:$0xff]
    %v90 = vld [vmem:[#allocation2 + $0x1a0] sm:$0xf]
    %v91 = vld [vmem:[#allocation2 + $0x1a4] sm:$0xff]
    %v92 = vld [vmem:[#allocation2 + $0x1ac] sm:$0xff]
    %v93 = vld [vmem:[#allocation2 + $0x1b4] sm:$0xf]
    %v94 = vld [vmem:[#allocation2 + $0x1b8] sm:$0xff]
    %v95 = vld [vmem:[#allocation2 + $0x1c0] sm:$0xff]
    %v96 = vld [vmem:[#allocation2 + $0x1c8] sm:$0xf]
    %v97 = vld [vmem:[#allocation2 + $0x1cc] sm:$0xff]
    %v98 = vld [vmem:[#allocation2 + $0x1d4] sm:$0xff]
    %v99 = vld [vmem:[#allocation2 + $0x1dc] sm:$0xf]
    %v102 = vunpack.c.l.b16 %v26
    %v103 = vunpack.c.h.b16 %v26
    %v104 = vunpack.c.l.b16 %v27
    %v105 = vunpack.c.h.b16 %v27
    %v106 = vpack.c.b16 %v104, %v102
    %v107 = vpack.c.b16 %v105, %v103
    %v181 = vunpack.c.l.b16 %v28
    %v182 = vunpack.c.h.b16 %v28
    %v183 = vunpack.c.l.b16 %v29
    %v184 = vunpack.c.h.b16 %v29
    %v185 = vunpack.c.l.b16 %v30
    %v186 = vunpack.c.l.b16 %v31
    %v187 = vunpack.c.h.b16 %v31
    %v188 = vunpack.c.l.b16 %v32
    %v189 = vunpack.c.h.b16 %v32
    %v190 = vunpack.c.l.b16 %v33
    %v191 = vunpack.c.l.b16 %v34
    %v192 = vunpack.c.h.b16 %v34
    %v193 = vunpack.c.l.b16 %v35
    %v194 = vunpack.c.h.b16 %v35
    %v195 = vunpack.c.l.b16 %v36
    %v196 = vunpack.c.l.b16 %v37
    %v197 = vunpack.c.h.b16 %v37
    %v198 = vunpack.c.l.b16 %v38
    %v199 = vunpack.c.h.b16 %v38
    %v200 = vunpack.c.l.b16 %v39
    %v201 = vunpack.c.l.b16 %v40
    %v202 = vunpack.c.h.b16 %v40
    %v203 = vunpack.c.l.b16 %v41
    %v204 = vunpack.c.h.b16 %v41
    %v205 = vunpack.c.l.b16 %v42
    %v206 = vunpack.c.l.b16 %v43
    %v207 = vunpack.c.h.b16 %v43
    %v208 = vunpack.c.l.b16 %v44
    %v209 = vunpack.c.h.b16 %v44
    %v210 = vunpack.c.l.b16 %v45
    %v211 = vunpack.c.l.b16 %v46
    %v212 = vunpack.c.h.b16 %v46
    %v213 = vunpack.c.l.b16 %v47
    %v214 = vunpack.c.h.b16 %v47
    %v215 = vunpack.c.l.b16 %v48
    %v216 = vunpack.c.l.b16 %v49
    %v217 = vunpack.c.h.b16 %v49
    %v218 = vunpack.c.l.b16 %v50
    %v219 = vunpack.c.h.b16 %v50
    %v220 = vunpack.c.l.b16 %v51
    %v221 = vunpack.c.l.b16 %v52
    %v222 = vunpack.c.h.b16 %v52
    %v223 = vunpack.c.l.b16 %v53
    %v224 = vunpack.c.h.b16 %v53
    %v225 = vunpack.c.l.b16 %v54
    %v226 = vunpack.c.l.b16 %v55
    %v227 = vunpack.c.h.b16 %v55
    %v228 = vunpack.c.l.b16 %v56
    %v229 = vunpack.c.h.b16 %v56
    %v230 = vunpack.c.l.b16 %v57
    %v231 = vunpack.c.l.b16 %v58
    %v232 = vunpack.c.h.b16 %v58
    %v233 = vunpack.c.l.b16 %v59
    %v234 = vunpack.c.h.b16 %v59
    %v235 = vunpack.c.l.b16 %v60
    %v236 = vunpack.c.l.b16 %v61
    %v237 = vunpack.c.h.b16 %v61
    %v238 = vunpack.c.l.b16 %v62
    %v239 = vunpack.c.h.b16 %v62
    %v240 = vunpack.c.l.b16 %v63
    %v241 = vunpack.c.l.b16 %v64
    %v242 = vunpack.c.h.b16 %v64
    %v243 = vunpack.c.l.b16 %v65
    %v244 = vunpack.c.h.b16 %v65
    %v245 = vunpack.c.l.b16 %v66
    %v246 = vunpack.c.l.b16 %v67
    %v247 = vunpack.c.h.b16 %v67
    %v248 = vunpack.c.l.b16 %v68
    %v249 = vunpack.c.h.b16 %v68
    %v250 = vunpack.c.l.b16 %v69
    %v251 = vunpack.c.l.b16 %v70
    %v252 = vunpack.c.h.b16 %v70
    %v253 = vunpack.c.l.b16 %v71
    %v254 = vunpack.c.h.b16 %v71
    %v255 = vunpack.c.l.b16 %v72
    %v256 = vunpack.c.l.b16 %v73
    %v257 = vunpack.c.h.b16 %v73
    %v258 = vunpack.c.l.b16 %v74
    %v259 = vunpack.c.h.b16 %v74
    %v260 = vunpack.c.l.b16 %v75
    %v261 = vunpack.c.l.b16 %v76
    %v262 = vunpack.c.h.b16 %v76
    %v263 = vunpack.c.l.b16 %v77
    %v264 = vunpack.c.h.b16 %v77
    %v265 = vunpack.c.l.b16 %v78
    %v266 = vunpack.c.l.b16 %v79
    %v267 = vunpack.c.h.b16 %v79
    %v268 = vunpack.c.l.b16 %v80
    %v269 = vunpack.c.h.b16 %v80
    %v270 = vunpack.c.l.b16 %v81
    %v271 = vunpack.c.l.b16 %v82
    %v272 = vunpack.c.h.b16 %v82
    %v273 = vunpack.c.l.b16 %v83
    %v274 = vunpack.c.h.b16 %v83
    %v275 = vunpack.c.l.b16 %v84
    %v276 = vunpack.c.l.b16 %v85
    %v277 = vunpack.c.h.b16 %v85
    %v278 = vunpack.c.l.b16 %v86
    %v279 = vunpack.c.h.b16 %v86
    %v280 = vunpack.c.l.b16 %v87
    %v281 = vunpack.c.l.b16 %v88
    %v282 = vunpack.c.h.b16 %v88
    %v283 = vunpack.c.l.b16 %v89
    %v284 = vunpack.c.h.b16 %v89
    %v285 = vunpack.c.l.b16 %v90
    %v286 = vunpack.c.l.b16 %v91
    %v287 = vunpack.c.h.b16 %v91
    %v288 = vunpack.c.l.b16 %v92
    %v289 = vunpack.c.h.b16 %v92
    %v290 = vunpack.c.l.b16 %v93
    %v291 = vunpack.c.l.b16 %v94
    %v292 = vunpack.c.h.b16 %v94
    %v293 = vunpack.c.l.b16 %v95
    %v294 = vunpack.c.h.b16 %v95
    %v295 = vunpack.c.l.b16 %v96
    %v296 = vunpack.c.l.b16 %v97
    %v297 = vunpack.c.h.b16 %v97
    %v298 = vunpack.c.l.b16 %v98
    %v299 = vunpack.c.h.b16 %v98
    %v300 = vunpack.c.l.b16 %v99
    %v301 = vpack.c.b16 %v186, %v181
    %v302 = vpack.c.b16 %v187, %v182
    %v303 = vpack.c.b16 %v188, %v183
    %v304 = vpack.c.b16 %v189, %v184
    %v305 = vpack.c.b16 %v190, %v185
    %v306 = vpack.c.b16 %v196, %v191
    %v307 = vpack.c.b16 %v197, %v192
    %v308 = vpack.c.b16 %v198, %v193
    %v309 = vpack.c.b16 %v199, %v194
    %v310 = vpack.c.b16 %v200, %v195
    %v311 = vpack.c.b16 %v206, %v201
    %v312 = vpack.c.b16 %v207, %v202
    %v313 = vpack.c.b16 %v208, %v203
    %v314 = vpack.c.b16 %v209, %v204
    %v315 = vpack.c.b16 %v210, %v205
    %v316 = vpack.c.b16 %v216, %v211
    %v317 = vpack.c.b16 %v217, %v212
    %v318 = vpack.c.b16 %v218, %v213
    %v319 = vpack.c.b16 %v219, %v214
    %v320 = vpack.c.b16 %v220, %v215
    %v321 = vpack.c.b16 %v226, %v221
    %v322 = vpack.c.b16 %v227, %v222
    %v323 = vpack.c.b16 %v228, %v223
    %v324 = vpack.c.b16 %v229, %v224
    %v325 = vpack.c.b16 %v230, %v225
    %v326 = vpack.c.b16 %v236, %v231
    %v327 = vpack.c.b16 %v237, %v232
    %v328 = vpack.c.b16 %v238, %v233
    %v329 = vpack.c.b16 %v239, %v234
    %v330 = vpack.c.b16 %v240, %v235
    %v331 = vpack.c.b16 %v246, %v241
    %v332 = vpack.c.b16 %v247, %v242
    %v333 = vpack.c.b16 %v248, %v243
    %v334 = vpack.c.b16 %v249, %v244
    %v335 = vpack.c.b16 %v250, %v245
    %v336 = vpack.c.b16 %v256, %v251
    %v337 = vpack.c.b16 %v257, %v252
    %v338 = vpack.c.b16 %v258, %v253
    %v339 = vpack.c.b16 %v259, %v254
    %v340 = vpack.c.b16 %v260, %v255
    %v341 = vpack.c.b16 %v266, %v261
    %v342 = vpack.c.b16 %v267, %v262
    %v343 = vpack.c.b16 %v268, %v263
    %v344 = vpack.c.b16 %v269, %v264
    %v345 = vpack.c.b16 %v270, %v265
    %v346 = vpack.c.b16 %v276, %v271
    %v347 = vpack.c.b16 %v277, %v272
    %v348 = vpack.c.b16 %v278, %v273
    %v349 = vpack.c.b16 %v279, %v274
    %v350 = vpack.c.b16 %v280, %v275
    %v351 = vpack.c.b16 %v286, %v281
    %v352 = vpack.c.b16 %v287, %v282
    %v353 = vpack.c.b16 %v288, %v283
    %v354 = vpack.c.b16 %v289, %v284
    %v355 = vpack.c.b16 %v290, %v285
    %v356 = vpack.c.b16 %v296, %v291
    %v357 = vpack.c.b16 %v297, %v292
    %v358 = vpack.c.b16 %v298, %v293
    %v359 = vpack.c.b16 %v299, %v294
    %v360 = vpack.c.b16 %v300, %v295
    %vm421 = vcmask 523264
    %v423 = vsel %vm421, %v107, 0
    %425 = vmatprep.subr.bf16.mxu0 %v337
    %426 = vmatpush1.bf16.msra.mxu0 %v336
    %427 = vmatprep.subr.bf16.mxu0 %v332
    %428 = vmatpush1.bf16.msra.mxu0 %v331
    %429 = vmatprep.subr.bf16.mxu0 %v327
    %430 = vmatpush1.bf16.msra.mxu0 %v326
    %431 = vmatprep.subr.bf16.mxu0 %v322
    %432 = vmatpush1.bf16.msra.mxu0 %v321
    %433 = vmatprep.subr.bf16.mxu0 %v317
    %434 = vmatpush1.bf16.msra.mxu0 %v316
    %435 = vmatprep.subr.bf16.mxu0 %v312
    %436 = vmatpush1.bf16.msra.mxu0 %v311
    %437 = vmatprep.subr.bf16.mxu0 %v307
    %438 = vmatpush1.bf16.msra.mxu0 %v306
    %439 = vmatprep.subr.bf16.mxu0 %v302
    %440 = vmatpush1.bf16.msra.mxu0 %v301
    %441 = vmatprep.subr.bf16.mxu0 0
    %442 = vmatpush2.bf16.msra.mxu0 0
    %443 = vmatprep.subr.bf16.mxu0 0
    %444 = vmatpush2.bf16.msra.mxu0 0
    %445 = vmatprep.subr.bf16.mxu0 0
    %446 = vmatpush2.bf16.msra.mxu0 0
    %447 = vmatprep.subr.bf16.mxu0 0
    %448 = vmatpush2.bf16.msra.mxu0 0
    %449 = vmatprep.subr.bf16.mxu0 %v357
    %450 = vmatpush2.bf16.msra.mxu0 %v356
    %451 = vmatprep.subr.bf16.mxu0 %v352
    %452 = vmatpush2.bf16.msra.mxu0 %v351
    %453 = vmatprep.subr.bf16.mxu0 %v347
    %454 = vmatpush2.bf16.msra.mxu0 %v346
    %455 = vmatprep.subr.bf16.mxu0 %v342
    %456 = vmatpush2.bf16.msra.mxu0 %v341
    %457 = vmatprep.mubr.bf16.mxu0 %v423
    %458 = vmatmul.mubr.bf16.gmra.mxu0 %v106
    %v459 = vpop.f32.mrf.mxu0
    %v460 = vadd.f32 0.0, %v459
    %v461 = vpop.f32.mrf.mxu0
    %v462 = vadd.f32 0.0, %v461
    %v463 = vpop.f32.mrf.mxu0
    %v464 = vadd.f32 0.0, %v463
    %v465 = vpop.f32.mrf.mxu0
    %v466 = vadd.f32 0.0, %v465
    %467 = vdwg.mxu0
    %468 = vmatprep.subr.bf16.mxu0 %v339
    %469 = vmatpush1.bf16.msra.mxu0 %v338
    %470 = vmatprep.subr.bf16.mxu0 %v334
    %471 = vmatpush1.bf16.msra.mxu0 %v333
    %472 = vmatprep.subr.bf16.mxu0 %v329
    %473 = vmatpush1.bf16.msra.mxu0 %v328
    %474 = vmatprep.subr.bf16.mxu0 %v324
    %475 = vmatpush1.bf16.msra.mxu0 %v323
    %476 = vmatprep.subr.bf16.mxu0 %v319
    %477 = vmatpush1.bf16.msra.mxu0 %v318
    %478 = vmatprep.subr.bf16.mxu0 %v314
    %479 = vmatpush1.bf16.msra.mxu0 %v313
    %480 = vmatprep.subr.bf16.mxu0 %v309
    %481 = vmatpush1.bf16.msra.mxu0 %v308
    %482 = vmatprep.subr.bf16.mxu0 %v304
    %483 = vmatpush1.bf16.msra.mxu0 %v303
    %484 = vmatprep.subr.bf16.mxu0 0
    %485 = vmatpush2.bf16.msra.mxu0 0
    %486 = vmatprep.subr.bf16.mxu0 0
    %487 = vmatpush2.bf16.msra.mxu0 0
    %488 = vmatprep.subr.bf16.mxu0 0
    %489 = vmatpush2.bf16.msra.mxu0 0
    %490 = vmatprep.subr.bf16.mxu0 0
    %491 = vmatpush2.bf16.msra.mxu0 0
    %492 = vmatprep.subr.bf16.mxu0 %v359
    %493 = vmatpush2.bf16.msra.mxu0 %v358
    %494 = vmatprep.subr.bf16.mxu0 %v354
    %495 = vmatpush2.bf16.msra.mxu0 %v353
    %496 = vmatprep.subr.bf16.mxu0 %v349
    %497 = vmatpush2.bf16.msra.mxu0 %v348
    %498 = vmatprep.subr.bf16.mxu0 %v344
    %499 = vmatpush2.bf16.msra.mxu0 %v343
    %500 = vmatprep.mubr.bf16.mxu0 %v423
    %501 = vmatmul.mubr.bf16.gmra.mxu0 %v106
    %v502 = vpop.f32.mrf.mxu0
    %v503 = vadd.f32 0.0, %v502
    %v504 = vpop.f32.mrf.mxu0
    %v505 = vadd.f32 0.0, %v504
    %v506 = vpop.f32.mrf.mxu0
    %v507 = vadd.f32 0.0, %v506
    %v508 = vpop.f32.mrf.mxu0
    %v509 = vadd.f32 0.0, %v508
    %510 = vdwg.mxu0
    %511 = vmatprep.subr.bf16.mxu0 0
    %512 = vmatpush1.bf16.msra.mxu0 %v340
    %513 = vmatprep.subr.bf16.mxu0 0
    %514 = vmatpush1.bf16.msra.mxu0 %v335
    %515 = vmatprep.subr.bf16.mxu0 0
    %516 = vmatpush1.bf16.msra.mxu0 %v330
    %517 = vmatprep.subr.bf16.mxu0 0
    %518 = vmatpush1.bf16.msra.mxu0 %v325
    %519 = vmatprep.subr.bf16.mxu0 0
    %520 = vmatpush1.bf16.msra.mxu0 %v320
    %521 = vmatprep.subr.bf16.mxu0 0
    %522 = vmatpush1.bf16.msra.mxu0 %v315
    %523 = vmatprep.subr.bf16.mxu0 0
    %524 = vmatpush1.bf16.msra.mxu0 %v310
    %525 = vmatprep.subr.bf16.mxu0 0
    %526 = vmatpush1.bf16.msra.mxu0 %v305
    %527 = vmatprep.subr.bf16.mxu0 0
    %528 = vmatpush2.bf16.msra.mxu0 0
    %529 = vmatprep.subr.bf16.mxu0 0
    %530 = vmatpush2.bf16.msra.mxu0 0
    %531 = vmatprep.subr.bf16.mxu0 0
    %532 = vmatpush2.bf16.msra.mxu0 0
    %533 = vmatprep.subr.bf16.mxu0 0
    %534 = vmatpush2.bf16.msra.mxu0 0
    %535 = vmatprep.subr.bf16.mxu0 0
    %536 = vmatpush2.bf16.msra.mxu0 %v360
    %537 = vmatprep.subr.bf16.mxu0 0
    %538 = vmatpush2.bf16.msra.mxu0 %v355
    %539 = vmatprep.subr.bf16.mxu0 0
    %540 = vmatpush2.bf16.msra.mxu0 %v350
    %541 = vmatprep.subr.bf16.mxu0 0
    %542 = vmatpush2.bf16.msra.mxu0 %v345
    %543 = vmatprep.mubr.bf16.mxu0 %v423
    %544 = vmatmul.mubr.bf16.gmra.mxu0 %v106
    %v545 = vpop.f32.mrf.mxu0
    %v546 = vadd.f32 0.0, %v545
    %v547 = vpop.f32.mrf.mxu0
    %v548 = vpop.f32.mrf.mxu0
    %v549 = vadd.f32 0.0, %v548
    %v550 = vpop.f32.mrf.mxu0
    %551 = vdwg.mxu0
    %552 = vst [vmem:[%s2] sm:$0xff] %v460
    %553 = vst [vmem:[%s2 + $0x8] sm:$0xff] %v462
    %554 = vst [vmem:[%s2 + $0x10] sm:$0xff] %v503
    %555 = vst [vmem:[%s2 + $0x18] sm:$0xff] %v505
    %556 = vst.msk [vmem:[%s2 + $0x20] sm:$0xff] %vm421, %v546
    %557 = vst [vmem:[%s2 + $0x28] sm:$0xff] %v464
    %558 = vst [vmem:[%s2 + $0x30] sm:$0xff] %v466
    %559 = vst [vmem:[%s2 + $0x38] sm:$0xff] %v507
    %560 = vst [vmem:[%s2 + $0x40] sm:$0xff] %v509
    %561 = vst.msk [vmem:[%s2 + $0x48] sm:$0xff] %vm421, %v549
    // Predicated region
    $region14: #{causal_self_attention.2} parent=1 // pred_check
      _
    $region15: #{causal_self_attention.2} parent=1 // pred_check_branch
      %563 = sbr.rel (0) target = $region17
    $region16: #{causal_self_attention.2} parent=1 // pred_region
      _
    $region17: #{causal_self_attention.2} parent=1 // pred_fallthru
      _
    // Predicated region
    $region18: #{causal_self_attention.2} parent=1 // pred_check
      _
    $region19: #{causal_self_attention.2} parent=1 // pred_check_branch
      %565 = sbr.rel (0) target = $region21
    $region20: #{causal_self_attention.2} parent=1 // pred_region
      _
    $region21: #{causal_self_attention.2} parent=1 // pred_fallthru
      _
    %566 = vsyncpa [#allocation3], 1

// kernel: causal_self_attention.3
$region0: #{causal_self_attention.3}
  #allocation0 [shape = 'u32[]', space=smem, size = 0x4, offset = 0x4, fixed_abs, tag = 'smem constant byte address 0x4 - core index']
  #allocation1 [shape = 'u32[144,128]{1,0:T(1,128)}', space=vmem, size = 0x12000, scoped, tag = 'internal scratch']
  %s0 = inlined_call_operand.vmem [shape: bf16[2,8,192], index: 0, kind: input, shape index: {}]
  %s1 = inlined_call_operand.vmem [shape: bf16[2,8,192], index: 1, kind: input, shape index: {}]
  %s2 = inlined_call_operand.vmem [shape: bf16[2,8,192], index: 2, kind: input, shape index: {}]
  %s3 = inlined_call_operand.vmem [shape: bf16[3,64,192], index: 3, kind: input, shape index: {}]
  %s4 = inlined_call_operand.hbm [shape: f32[2,8,192], index: 4, kind: output, shape index: {}]
  %s5 = sld [smem:[#allocation0]]
  $region49: #{causal_self_attention.3} parent=0
    _
  %s7 = ssub.s32 1, %s5
  %s8 = scalar_select 0, %s7, %s5
  $region1: #{causal_self_attention.3} parent=0
    #allocation2 [shape = 'u8[16384]{0}', space=vmem, size = 0x4000, scoped, tag = 'output window, operand 0']
    #allocation3 [shape = 's32[2]{0}', space=sflag, size = 0x8, scoped, tag = 'scoped memory for causal_self_attention.3']
    %9 = vsyncpa [#allocation3], 0
    %s10 = scalar_lea.sflag [#allocation3], 1
    %11 = vsyncpa %s10, 0
    loop: start=0, step=1, limit=4
    $region2: #{causal_self_attention.3} parent=1 // loop_pre_header
      _
    $region3: #{causal_self_attention.3} parent=1 // loop_header
      %s13 = sphi 0, %s17
      %p14 = scmp.ge.s32.totalorder %s13, 4
      %s23 = sphi 0, %s25
      %s26 = sphi 0, %s23
      %s27 = sphi 0, %s26
      %s43 = sphi 0, %s27
      %s49 = sphi 0, %s51
      %s52 = sphi 0, %s49
      %s53 = sphi 0, %s52
      %s69 = sphi 0, %s53
      %s75 = sphi 0, %s77
      %s78 = sphi 0, %s75
      %s79 = sphi 0, %s78
      %s95 = sphi 0, %s79
      %s99 = sphi 0, %s99
      %s101 = sphi 0, %s99
      %s102 = sphi 0, %s101
      %s116 = sphi 0, %s102
      %s122 = sphi 0, %s124
      %s125 = sphi 0, %s122
      %s126 = sphi 0, %s125
      %s142 = sphi 0, %s126
    $region4: #{causal_self_attention.3} parent=1 // loop_header_branch
      %16 = sbr.rel (%p14) target = $region8
    $region5: #{causal_self_attention.3} parent=1 // loop_body
      %s18 = ssub.s32 %s13, 1
      %s19 = ssub.s32 %s13, 2
      %s20 = sadd.s32 %s13, 1
      %s21 = ssub.s32 %s13, %s20
      %p22 = scmp.eq.s32.totalorder %s21, 0
      %s24 = sadd.s32 %s23, 1
      %s25 = scalar_select %p22, %s23, %s24
      %p28 = pneg %p22
      %p29 = scmp.eq.s32.totalorder %s13, 1
      %p30 = por %p28, %p29
      %p31 = scmp.ne.s32.totalorder %s23, %s26
      %p32 = scmp.eq.s32.totalorder %s13, 0
      %p33 = por %p31, %p32
      %p34 = scmp.ne.s32.totalorder %s23, %s26
      %p35 = scmp.eq.s32.totalorder %s18, 1
      %p36 = por %p34, %p35
      %p37 = scmp.ne.s32.totalorder %s26, %s27
      %p38 = scmp.eq.s32.totalorder %s18, 0
      %p39 = por %p37, %p38
      %p40 = scmp.ne.s32.totalorder %s26, %s27
      %p41 = scmp.eq.s32.totalorder %s19, 1
      %p42 = por %p40, %p41
      %p44 = scmp.ne.s32.totalorder %s27, %s43
      %p45 = scmp.eq.s32.totalorder %s19, 0
      %p46 = por %p44, %p45
      %s47 = ssub.s32 %s13, %s20
      %p48 = scmp.eq.s32.totalorder %s47, 0
      %s50 = sadd.s32 %s49, 1
      %s51 = scalar_select %p48, %s49, %s50
      %p54 = pneg %p48
      %p55 = scmp.eq.s32.totalorder %s13, 1
      %p56 = por %p54, %p55
      %p57 = scmp.ne.s32.totalorder %s49, %s52
      %p58 = scmp.eq.s32.totalorder %s13, 0
      %p59 = por %p57, %p58
      %p60 = scmp.ne.s32.totalorder %s49, %s52
      %p61 = scmp.eq.s32.totalorder %s18, 1
      %p62 = por %p60, %p61
      %p63 = scmp.ne.s32.totalorder %s52, %s53
      %p64 = scmp.eq.s32.totalorder %s18, 0
      %p65 = por %p63, %p64
      %p66 = scmp.ne.s32.totalorder %s52, %s53
      %p67 = scmp.eq.s32.totalorder %s19, 1
      %p68 = por %p66, %p67
      %p70 = scmp.ne.s32.totalorder %s53, %s69
      %p71 = scmp.eq.s32.totalorder %s19, 0
      %p72 = por %p70, %p71
      %s73 = ssub.s32 %s13, %s20
      %p74 = scmp.eq.s32.totalorder %s73, 0
      %s76 = sadd.s32 %s75, 1
      %s77 = scalar_select %p74, %s75, %s76
      %p80 = pneg %p74
      %p81 = scmp.eq.s32.totalorder %s13, 1
      %p82 = por %p80, %p81
      %p83 = scmp.ne.s32.totalorder %s75, %s78
      %p84 = scmp.eq.s32.totalorder %s13, 0
      %p85 = por %p83, %p84
      %p86 = scmp.ne.s32.totalorder %s75, %s78
      %p87 = scmp.eq.s32.totalorder %s18, 1
      %p88 = por %p86, %p87
      %p89 = scmp.ne.s32.totalorder %s78, %s79
      %p90 = scmp.eq.s32.totalorder %s18, 0
      %p91 = por %p89, %p90
      %p92 = scmp.ne.s32.totalorder %s78, %s79
      %p93 = scmp.eq.s32.totalorder %s19, 1
      %p94 = por %p92, %p93
      %p96 = scmp.ne.s32.totalorder %s79, %s95
      %p97 = scmp.eq.s32.totalorder %s19, 0
      %p98 = por %p96, %p97
      %s100 = sadd.s32 %s99, 1
      %p103 = scmp.eq.s32.totalorder %s13, 1
      %p104 = scmp.ne.s32.totalorder %s99, %s101
      %p105 = scmp.eq.s32.totalorder %s13, 0
      %p106 = por %p104, %p105
      %p107 = scmp.ne.s32.totalorder %s99, %s101
      %p108 = scmp.eq.s32.totalorder %s18, 1
      %p109 = por %p107, %p108
      %p110 = scmp.ne.s32.totalorder %s101, %s102
      %p111 = scmp.eq.s32.totalorder %s18, 0
      %p112 = por %p110, %p111
      %p113 = scmp.ne.s32.totalorder %s101, %s102
      %p114 = scmp.eq.s32.totalorder %s19, 1
      %p115 = por %p113, %p114
      %p117 = scmp.ne.s32.totalorder %s102, %s116
      %p118 = scmp.eq.s32.totalorder %s19, 0
      %p119 = por %p117, %p118
      %s120 = ssub.s32 %s13, %s20
      %p121 = scmp.eq.s32.totalorder %s120, 0
      %s123 = sadd.s32 %s122, 1
      %s124 = scalar_select %p121, %s122, %s123
      %p127 = pneg %p121
      %p128 = scmp.eq.s32.totalorder %s13, 1
      %p129 = por %p127, %p128
      %p130 = scmp.ne.s32.totalorder %s122, %s125
      %p131 = scmp.eq.s32.totalorder %s13, 0
      %p132 = por %p130, %p131
      %p133 = scmp.ne.s32.totalorder %s122, %s125
      %p134 = scmp.eq.s32.totalorder %s18, 1
      %p135 = por %p133, %p134
      %p136 = scmp.ne.s32.totalorder %s125, %s126
      %p137 = scmp.eq.s32.totalorder %s18, 0
      %p138 = por %p136, %p137
      %p139 = scmp.ne.s32.totalorder %s125, %s126
      %p140 = scmp.eq.s32.totalorder %s19, 1
      %p141 = por %p139, %p140
      %p143 = scmp.ne.s32.totalorder %s126, %s142
      %p144 = scmp.eq.s32.totalorder %s19, 0
      %p145 = por %p143, %p144
      %p146 = scmp.le.s32.totalorder 1, %s13
      %p147 = scmp.lt.s32.totalorder %s13, 3
      %p148 = pnand %p146, %p147
      %p149 = pneg %p148
      // Predicated region
      $region9: #{causal_self_attention.3} parent=5 // pred_check
        _
      $region10: #{causal_self_attention.3} parent=5 // pred_check_branch
        %151 = sbr.rel (%p148) target = $region12
      $region11: #{causal_self_attention.3} parent=5 // pred_region
        %s152 = ssub.s32 %s13, 1
        // Predicated region
        $region13: #{causal_self_attention.3} parent=11 // pred_check
          %p153 = pneg %p112
        $region14: #{causal_self_attention.3} parent=11 // pred_check_branch
          %155 = sbr.rel (%p153) target = $region16
        $region15: #{causal_self_attention.3} parent=11 // pred_region
          _
        $region16: #{causal_self_attention.3} parent=11 // pred_fallthru
          _
      $region12: #{causal_self_attention.3} parent=5 // pred_fallthru
        _
      %p156 = scmp.lt.s32.totalorder %s13, 2
      // Predicated region
      $region17: #{causal_self_attention.3} parent=5 // pred_check
        %p157 = pneg %p156
      $region18: #{causal_self_attention.3} parent=5 // pred_check_branch
        %159 = sbr.rel (%p157) target = $region20
      $region19: #{causal_self_attention.3} parent=5 // pred_region
        // Predicated region
        $region21: #{causal_self_attention.3} parent=19 // pred_check
          %p160 = pneg %p33
        $region22: #{causal_self_attention.3} parent=19 // pred_check_branch
          %162 = sbr.rel (%p160) target = $region24
        $region23: #{causal_self_attention.3} parent=19 // pred_region
          %p163 = scmp.lt.s32.totalorder %s13, 1
          %s164 = scalar_select %p163, %s13, 1
          %s165 = smul.addr %s164, 2
          %s166 = smul.addr %s165, 4
          %s167 = scalar_lea.vmem %s0, %s166
        $region24: #{causal_self_attention.3} parent=19 // pred_fallthru
          _
        // Predicated region
        $region25: #{causal_self_attention.3} parent=19 // pred_check
          %p168 = pneg %p59
        $region26: #{causal_self_attention.3} parent=19 // pred_check_branch
          %170 = sbr.rel (%p168) target = $region28
        $region27: #{causal_self_attention.3} parent=19 // pred_region
          %p171 = scmp.lt.s32.totalorder %s13, 1
          %s172 = scalar_select %p171, %s13, 1
          %s173 = smul.addr %s172, 2
          %s174 = smul.addr %s173, 4
          %s175 = scalar_lea.vmem %s1, %s174
        $region28: #{causal_self_attention.3} parent=19 // pred_fallthru
          _
        // Predicated region
        $region29: #{causal_self_attention.3} parent=19 // pred_check
          %p176 = pneg %p85
        $region30: #{causal_self_attention.3} parent=19 // pred_check_branch
          %178 = sbr.rel (%p176) target = $region32
        $region31: #{causal_self_attention.3} parent=19 // pred_region
          %p179 = scmp.lt.s32.totalorder %s13, 1
          %s180 = scalar_select %p179, %s13, 1
          %s181 = smul.addr %s180, 2
          %s182 = smul.addr %s181, 4
          %s183 = scalar_lea.vmem %s2, %s182
        $region32: #{causal_self_attention.3} parent=19 // pred_fallthru
          _
      $region20: #{causal_self_attention.3} parent=5 // pred_fallthru
        _
      %p184 = scmp.le.s32.totalorder 1, %s13
      %p185 = scmp.lt.s32.totalorder %s13, 3
      %p186 = pnand %p184, %p185
      %p187 = pneg %p186
      // Predicated region
      $region33: #{causal_self_attention.3} parent=5 // pred_check
        _
      $region34: #{causal_self_attention.3} parent=5 // pred_check_branch
        %189 = sbr.rel (%p186) target = $region36
      $region35: #{causal_self_attention.3} parent=5 // pred_region
        %s190 = ssub.s32 %s13, 1
        %p191 = scmp.lt.s32.totalorder %s18, 1
        %s192 = scalar_select %p191, %s18, 1
        %s193 = smul.addr %s192, 2
        %s194 = smul.addr %s193, 4
        %s195 = scalar_lea.vmem %s0, %s194
        %p196 = pneg %p39
        %p197 = pneg %p36
        %p198 = scmp.lt.s32.totalorder %s18, 1
        %s199 = scalar_select %p198, %s18, 1
        %s200 = smul.addr %s199, 2
        %s201 = smul.addr %s200, 4
        %s202 = scalar_lea.vmem %s1, %s201
        %p203 = pneg %p65
        %p204 = pneg %p62
        %p205 = scmp.lt.s32.totalorder %s18, 1
        %s206 = scalar_select %p205, %s18, 1
        %s207 = smul.addr %s206, 2
        %s208 = smul.addr %s207, 4
        %s209 = scalar_lea.vmem %s2, %s208
        %p210 = pneg %p91
        %p211 = pneg %p88
        %p212 = pneg %p112
        %p213 = pneg %p109
        %p214 = pneg %p138
        %p215 = pneg %p135
        %s216 = sand.u32 %s125, 1
        %s217 = scalar_lea.sflag [#allocation3], %s216
        %s218 = sand.u32 %s125, 1
        %s219 = smul.addr %s218, 16
        %s220 = scalar_lea.vmem [#allocation2], %s219
        %p221 = scmp.lt.s32.totalorder %s18, 1
        %s222 = scalar_select %p221, %s18, 1
        %s223 = smul.addr %s222, 2
        %s224 = smul.addr %s223, 4
        %s225 = scalar_lea.vmem %s0, %s224
        %p226 = scmp.lt.s32.totalorder %s18, 1
        %s227 = scalar_select %p226, %s18, 1
        %s228 = smul.addr %s227, 2
        %s229 = smul.addr %s228, 4
        %s230 = scalar_lea.vmem %s1, %s229
        %p231 = scmp.lt.s32.totalorder %s18, 1
        %s232 = scalar_select %p231, %s18, 1
        %s233 = smul.addr %s232, 2
        %s234 = smul.addr %s233, 4
        %s235 = scalar_lea.vmem %s2, %s234
        %v238 = vlaneseq
        %v239 = vshrl.u32 %v238, 7
        %v240 = vlaneseq
        %v241 = vand.u32 %v240, 127
        %vm242 = vcmp.le.s32.totalorder %v241, %v239
        %v243 = vld [vmem:[%s225] sm:$0xf]
        %v244 = vmul.bf16 %v243, 1040203264
        %v245 = vld [vmem:[%s230] sm:$0xf]
        %v246 = vld [vmem:[%s235] sm:$0xf]
        %vm247 = vcmask 523264
        %v249 = vsel %vm247, %v244, 0
        %v252 = vsel %vm247, %v245, 0
        %254 = vmatprep.subr.bf16.mxu0 0
        %255 = vmatpush1.bf16.xpose.msra.mxu0 0
        %256 = vmatprep.subr.bf16.mxu0 0
        %257 = vmatpush1.bf16.xpose.msra.mxu0 0
        %258 = vmatprep.subr.bf16.mxu0 0
        %259 = vmatpush1.bf16.xpose.msra.mxu0 0
        %260 = vmatprep.subr.bf16.mxu0 0
        %261 = vmatpush1.bf16.xpose.msra.mxu0 0
        %262 = vmatprep.subr.bf16.mxu0 0
        %263 = vmatpush1.bf16.xpose.msra.mxu0 0
        %264 = vmatprep.subr.bf16.mxu0 0
        %265 = vmatpush1.bf16.xpose.msra.mxu0 0
        %266 = vmatprep.subr.bf16.mxu0 0
        %267 = vmatpush1.bf16.xpose.msra.mxu0 0
        %268 = vmatprep.subr.bf16.mxu0 0
        %269 = vmatpush1.bf16.xpose.msra.mxu0 %v252
        %270 = vmatprep.subr.bf16.mxu0 0
        %271 = vmatpush2.bf16.xpose.msra.mxu0 0
        %272 = vmatprep.subr.bf16.mxu0 0
        %273 = vmatpush2.bf16.xpose.msra.mxu0 0
        %274 = vmatprep.subr.bf16.mxu0 0
        %275 = vmatpush2.bf16.xpose.msra.mxu0 0
        %276 = vmatprep.subr.bf16.mxu0 0
        %277 = vmatpush2.bf16.xpose.msra.mxu0 0
        %278 = vmatprep.subr.bf16.mxu0 0
        %279 = vmatpush2.bf16.xpose.msra.mxu0 0
        %280 = vmatprep.subr.bf16.mxu0 0
        %281 = vmatpush2.bf16.xpose.msra.mxu0 0
        %282 = vmatprep.subr.bf16.mxu0 0
        %283 = vmatpush2.bf16.xpose.msra.mxu0 0
        %284 = vmatprep.subr.bf16.mxu0 0
        %285 = vmatpush2.bf16.xpose.msra.mxu0 0
        %286 = vmatprep.mubr.bf16.mxu0 0
        %287 = vmatmul.mubr.bf16.gmra.mxu0 %v249
        %v288 = vpop.f32.mrf.mxu0
        %v289 = vadd.f32 0.0, %v288
        %v290 = vpop.f32.mrf.mxu0
        %v291 = vpop.f32.mrf.mxu0
        %v292 = vpop.f32.mrf.mxu0
        %293 = vdwg.mxu0
        %v294 = vsel %vm242, %v289, -1e+30
        %vm295 = vcmask 64512
        %v296 = vsel %vm295, %v294, -inf
        %297 = vmax.xlane.f32.xlu0 %v296
        %v298 = vpop.xlane.xlu0 %297
        %v299 = vsub.f32 %v294, %v298
        %v300 = vmul.f32 %v299, 1.442695
        %v301 = vpow.pop %v300
        %v302 = vsel %vm295, %v301, 0.0
        %303 = vadd.xlane.f32.xlu0 %v302
        %v304 = vpop.xlane.xlu0 %303
        %v305 = vrcp.pop %v304
        %v306 = vmul.f32 %v301, %v305
        %v307 = vpack.c.bf16 %v306, %v306
        %v309 = vsel %vm295, %v307, 0
        %vm311 = vcmask 1043456
        %v313 = vsel %vm311, %v246, 0
        %315 = vmatprep.subr.bf16.mxu0 0
        %316 = vmatpush1.bf16.msra.mxu0 0
        %317 = vmatprep.subr.bf16.mxu0 0
        %318 = vmatpush1.bf16.msra.mxu0 0
        %319 = vmatprep.subr.bf16.mxu0 0
        %320 = vmatpush1.bf16.msra.mxu0 0
        %321 = vmatprep.subr.bf16.mxu0 0
        %322 = vmatpush1.bf16.msra.mxu0 0
        %323 = vmatprep.subr.bf16.mxu0 0
        %324 = vmatpush1.bf16.msra.mxu0 0
        %325 = vmatprep.subr.bf16.mxu0 0
        %326 = vmatpush1.bf16.msra.mxu0 0
        %327 = vmatprep.subr.bf16.mxu0 0
        %328 = vmatpush1.bf16.msra.mxu0 0
        %329 = vmatprep.subr.bf16.mxu0 0
        %330 = vmatpush1.bf16.msra.mxu0 %v313
        %331 = vmatprep.subr.bf16.mxu0 0
        %332 = vmatpush2.bf16.msra.mxu0 0
        %333 = vmatprep.subr.bf16.mxu0 0
        %334 = vmatpush2.bf16.msra.mxu0 0
        %335 = vmatprep.subr.bf16.mxu0 0
        %336 = vmatpush2.bf16.msra.mxu0 0
        %337 = vmatprep.subr.bf16.mxu0 0
        %338 = vmatpush2.bf16.msra.mxu0 0
        %339 = vmatprep.subr.bf16.mxu0 0
        %340 = vmatpush2.bf16.msra.mxu0 0
        %341 = vmatprep.subr.bf16.mxu0 0
        %342 = vmatpush2.bf16.msra.mxu0 0
        %343 = vmatprep.subr.bf16.mxu0 0
        %344 = vmatpush2.bf16.msra.mxu0 0
        %345 = vmatprep.subr.bf16.mxu0 0
        %346 = vmatpush2.bf16.msra.mxu0 0
        %347 = vmatprep.mubr.bf16.mxu0 0
        %348 = vmatmul.mubr.bf16.gmra.mxu0 %v309
        %v349 = vpop.f32.mrf.mxu0
        %v350 = vadd.f32 0.0, %v349
        %v351 = vpop.f32.mrf.mxu0
        %v352 = vpop.f32.mrf.mxu0
        %v353 = vpop.f32.mrf.mxu0
        %354 = vdwg.mxu0
        %v355 = vpack.c.bf16 %v350, %v350
        %v356 = vld [vmem:[%s3] sm:$0xff]
        %v357 = vld [vmem:[%s3 + $0x8] sm:$0xff]
        %v358 = vld [vmem:[%s3 + $0x10] sm:$0xff]
        %v359 = vld [vmem:[%s3 + $0x18] sm:$0xff]
        %v360 = vld [vmem:[%s3 + $0x20] sm:$0xff]
        %v361 = vld [vmem:[%s3 + $0x28] sm:$0xff]
        %v362 = vld [vmem:[%s3 + $0x30] sm:$0xff]
        %v363 = vld [vmem:[%s3 + $0x38] sm:$0xff]
        %v365 = vunpack.c.l.b16 %v244
        %v366 = vpack.c.b16 %v365, %v365
        %367 = vrot.lane.b32.xlu0 %v366, 64
        %v368 = vpop.permute.xlu0 %367
        %v370 = vunpack.c.l.b16 %v245
        %v371 = vpack.c.b16 %v370, %v370
        %372 = vrot.lane.b32.xlu0 %v371, 64
        %v373 = vpop.permute.xlu0 %372
        %v375 = vsel %vm247, %v368, 0
        %v378 = vsel %vm247, %v373, 0
        %380 = vmatprep.subr.bf16.mxu0 0
        %381 = vmatpush1.bf16.xpose.msra.mxu0 0
        %382 = vmatprep.subr.bf16.mxu0 0
        %383 = vmatpush1.bf16.xpose.msra.mxu0 0
        %384 = vmatprep.subr.bf16.mxu0 0
        %385 = vmatpush1.bf16.xpose.msra.mxu0 0
        %386 = vmatprep.subr.bf16.mxu0 0
        %387 = vmatpush1.bf16.xpose.msra.mxu0 0
        %388 = vmatprep.subr.bf16.mxu0 0
        %389 = vmatpush1.bf16.xpose.msra.mxu0 0
        %390 = vmatprep.subr.bf16.mxu0 0
        %391 = vmatpush1.bf16.xpose.msra.mxu0 0
        %392 = vmatprep.subr.bf16.mxu0 0
        %393 = vmatpush1.bf16.xpose.msra.mxu0 0
        %394 = vmatprep.subr.bf16.mxu0 0
        %395 = vmatpush1.bf16.xpose.msra.mxu0 %v378
        %396 = vmatprep.subr.bf16.mxu0 0
        %397 = vmatpush2.bf16.xpose.msra.mxu0 0
        %398 = vmatprep.subr.bf16.mxu0 0
        %399 = vmatpush2.bf16.xpose.msra.mxu0 0
        %400 = vmatprep.subr.bf16.mxu0 0
        %401 = vmatpush2.bf16.xpose.msra.mxu0 0
        %402 = vmatprep.subr.bf16.mxu0 0
        %403 = vmatpush2.bf16.xpose.msra.mxu0 0
        %404 = vmatprep.subr.bf16.mxu0 0
        %405 = vmatpush2.bf16.xpose.msra.mxu0 0
        %406 = vmatprep.subr.bf16.mxu0 0
        %407 = vmatpush2.bf16.xpose.msra.mxu0 0
        %408 = vmatprep.subr.bf16.mxu0 0
        %409 = vmatpush2.bf16.xpose.msra.mxu0 0
        %410 = vmatprep.subr.bf16.mxu0 0
        %411 = vmatpush2.bf16.xpose.msra.mxu0 0
        %412 = vmatprep.mubr.bf16.mxu0 0
        %413 = vmatmul.mubr.bf16.gmra.mxu0 %v375
        %v414 = vpop.f32.mrf.mxu0
        %v415 = vadd.f32 0.0, %v414
        %v416 = vpop.f32.mrf.mxu0
        %v417 = vpop.f32.mrf.mxu0
        %v418 = vpop.f32.mrf.mxu0
        %419 = vdwg.mxu0
        %v420 = vsel %vm242, %v415, -1e+30
        %v421 = vsel %vm295, %v420, -inf
        %422 = vmax.xlane.f32.xlu0 %v421
        %v423 = vpop.xlane.xlu0 %422
        %v424 = vsub.f32 %v420, %v423
        %v425 = vmul.f32 %v424, 1.442695
        %v426 = vpow.pop %v425
        %v427 = vsel %vm295, %v426, 0.0
        %428 = vadd.xlane.f32.xlu0 %v427
        %v429 = vpop.xlane.xlu0 %428
        %v430 = vrcp.pop %v429
        %v431 = vmul.f32 %v426, %v430
        %v432 = vpack.c.bf16 %v431, %v431
        %v434 = vunpack.c.l.b16 %v246
        %v435 = vpack.c.b16 %v434, %v434
        %436 = vrot.lane.b32.xlu0 %v435, 64
        %v437 = vpop.permute.xlu0 %436
        %v439 = vsel %vm295, %v432, 0
        %v442 = vsel %vm311, %v437, 0
        %444 = vmatprep.subr.bf16.mxu0 0
        %445 = vmatpush1.bf16.msra.mxu0 0
        %446 = vmatprep.subr.bf16.mxu0 0
        %447 = vmatpush1.bf16.msra.mxu0 0
        %448 = vmatprep.subr.bf16.mxu0 0
        %449 = vmatpush1.bf16.msra.mxu0 0
        %450 = vmatprep.subr.bf16.mxu0 0
        %451 = vmatpush1.bf16.msra.mxu0 0
        %452 = vmatprep.subr.bf16.mxu0 0
        %453 = vmatpush1.bf16.msra.mxu0 0
        %454 = vmatprep.subr.bf16.mxu0 0
        %455 = vmatpush1.bf16.msra.mxu0 0
        %456 = vmatprep.subr.bf16.mxu0 0
        %457 = vmatpush1.bf16.msra.mxu0 0
        %458 = vmatprep.subr.bf16.mxu0 0
        %459 = vmatpush1.bf16.msra.mxu0 %v442
        %460 = vmatprep.subr.bf16.mxu0 0
        %461 = vmatpush2.bf16.msra.mxu0 0
        %462 = vmatprep.subr.bf16.mxu0 0
        %463 = vmatpush2.bf16.msra.mxu0 0
        %464 = vmatprep.subr.bf16.mxu0 0
        %465 = vmatpush2.bf16.msra.mxu0 0
        %466 = vmatprep.subr.bf16.mxu0 0
        %467 = vmatpush2.bf16.msra.mxu0 0
        %468 = vmatprep.subr.bf16.mxu0 0
        %469 = vmatpush2.bf16.msra.mxu0 0
        %470 = vmatprep.subr.bf16.mxu0 0
        %471 = vmatpush2.bf16.msra.mxu0 0
        %472 = vmatprep.subr.bf16.mxu0 0
        %473 = vmatpush2.bf16.msra.mxu0 0
        %474 = vmatprep.subr.bf16.mxu0 0
        %475 = vmatpush2.bf16.msra.mxu0 0
        %476 = vmatprep.mubr.bf16.mxu0 0
        %477 = vmatmul.mubr.bf16.gmra.mxu0 %v439
        %v478 = vpop.f32.mrf.mxu0
        %v479 = vadd.f32 0.0, %v478
        %v480 = vpop.f32.mrf.mxu0
        %v481 = vpop.f32.mrf.mxu0
        %v482 = vpop.f32.mrf.mxu0
        %483 = vdwg.mxu0
        %v484 = vpack.c.bf16 %v479, %v479
        %s485 = scalar_lea.vmem %s3, 64
        %v486 = vld [vmem:[%s485] sm:$0xff]
        %v487 = vld [vmem:[%s485 + $0x8] sm:$0xff]
        %v488 = vld [vmem:[%s485 + $0x10] sm:$0xff]
        %v489 = vld [vmem:[%s485 + $0x18] sm:$0xff]
        %v490 = vld [vmem:[%s485 + $0x20] sm:$0xff]
        %v491 = vld [vmem:[%s485 + $0x28] sm:$0xff]
        %v492 = vld [vmem:[%s485 + $0x30] sm:$0xff]
        %v493 = vld [vmem:[%s485 + $0x38] sm:$0xff]
        %v502 = vunpack.c.l.b16 %v486
        %v503 = vunpack.c.h.b16 %v486
        %v504 = vunpack.c.l.b16 %v487
        %v505 = vunpack.c.h.b16 %v487
        %v506 = vunpack.c.l.b16 %v488
        %v507 = vunpack.c.h.b16 %v488
        %v508 = vunpack.c.l.b16 %v489
        %v509 = vunpack.c.h.b16 %v489
        %v510 = vunpack.c.l.b16 %v490
        %v511 = vunpack.c.h.b16 %v490
        %v512 = vunpack.c.l.b16 %v491
        %v513 = vunpack.c.h.b16 %v491
        %v514 = vunpack.c.l.b16 %v492
        %v515 = vunpack.c.h.b16 %v492
        %v516 = vunpack.c.l.b16 %v493
        %v517 = vunpack.c.h.b16 %v493
        %v518 = vpack.c.b16 %v504, %v502
        %v519 = vpack.c.b16 %v505, %v503
        %v520 = vpack.c.b16 %v508, %v506
        %v521 = vpack.c.b16 %v509, %v507
        %v522 = vpack.c.b16 %v512, %v510
        %v523 = vpack.c.b16 %v513, %v511
        %v524 = vpack.c.b16 %v516, %v514
        %v525 = vpack.c.b16 %v517, %v515
        %v535 = vsel %vm247, %v484, 0
        %537 = vmatprep.subr.bf16.mxu0 0
        %538 = vmatpush1.bf16.msra.mxu0 0
        %539 = vmatprep.subr.bf16.mxu0 0
        %540 = vmatpush1.bf16.msra.mxu0 0
        %541 = vmatprep.subr.bf16.mxu0 0
        %542 = vmatpush1.bf16.msra.mxu0 0
        %543 = vmatprep.subr.bf16.mxu0 0
        %544 = vmatpush1.bf16.msra.mxu0 0
        %545 = vmatprep.subr.bf16.mxu0 %v525
        %546 = vmatpush1.bf16.msra.mxu0 %v524
        %547 = vmatprep.subr.bf16.mxu0 %v523
        %548 = vmatpush1.bf16.msra.mxu0 %v522
        %549 = vmatprep.subr.bf16.mxu0 %v521
        %550 = vmatpush1.bf16.msra.mxu0 %v520
        %551 = vmatprep.subr.bf16.mxu0 %v519
        %552 = vmatpush1.bf16.msra.mxu0 %v518
        %553 = vmatprep.subr.bf16.mxu0 0
        %554 = vmatpush2.bf16.msra.mxu0 0
        %555 = vmatprep.subr.bf16.mxu0 0
        %556 = vmatpush2.bf16.msra.mxu0 0
        %557 = vmatprep.subr.bf16.mxu0 0
        %558 = vmatpush2.bf16.msra.mxu0 0
        %559 = vmatprep.subr.bf16.mxu0 0
        %560 = vmatpush2.bf16.msra.mxu0 0
        %561 = vmatprep.subr.bf16.mxu0 0
        %562 = vmatpush2.bf16.msra.mxu0 0
        %563 = vmatprep.subr.bf16.mxu0 0
        %564 = vmatpush2.bf16.msra.mxu0 0
        %565 = vmatprep.subr.bf16.mxu0 0
        %566 = vmatpush2.bf16.msra.mxu0 0
        %567 = vmatprep.subr.bf16.mxu0 0
        %568 = vmatpush2.bf16.msra.mxu0 0
        %569 = vmatprep.mubr.bf16.mxu0 0
        %570 = vmatmul.mubr.bf16.gmra.mxu0 %v535
        %v571 = vpop.f32.mrf.mxu0
        %v572 = vadd.f32 0.0, %v571
        %v573 = vpop.f32.mrf.mxu0
        %v574 = vadd.f32 0.0, %v573
        %v575 = vpop.f32.mrf.mxu0
        %v576 = vpop.f32.mrf.mxu0
        %577 = vdwg.mxu0
        %v586 = vunpack.c.l.b16 %v356
        %v587 = vunpack.c.h.b16 %v356
        %v588 = vunpack.c.l.b16 %v357
        %v589 = vunpack.c.h.b16 %v357
        %v590 = vunpack.c.l.b16 %v358
        %v591 = vunpack.c.h.b16 %v358
        %v592 = vunpack.c.l.b16 %v359
        %v593 = vunpack.c.h.b16 %v359
        %v594 = vunpack.c.l.b16 %v360
        %v595 = vunpack.c.h.b16 %v360
        %v596 = vunpack.c.l.b16 %v361
        %v597 = vunpack.c.h.b16 %v361
        %v598 = vunpack.c.l.b16 %v362
        %v599 = vunpack.c.h.b16 %v362
        %v600 = vunpack.c.l.b16 %v363
        %v601 = vunpack.c.h.b16 %v363
        %v602 = vpack.c.b16 %v588, %v586
        %v603 = vpack.c.b16 %v589, %v587
        %v604 = vpack.c.b16 %v592, %v590
        %v605 = vpack.c.b16 %v593, %v591
        %v606 = vpack.c.b16 %v596, %v594
        %v607 = vpack.c.b16 %v597, %v595
        %v608 = vpack.c.b16 %v600, %v598
        %v609 = vpack.c.b16 %v601, %v599
        %v619 = vsel %vm247, %v355, 0
        %621 = vmatprep.subr.bf16.mxu0 0
        %622 = vmatpush1.bf16.msra.mxu0 0
        %623 = vmatprep.subr.bf16.mxu0 0
        %624 = vmatpush1.bf16.msra.mxu0 0
        %625 = vmatprep.subr.bf16.mxu0 0
        %626 = vmatpush1.bf16.msra.mxu0 0
        %627 = vmatprep.subr.bf16.mxu0 0
        %628 = vmatpush1.bf16.msra.mxu0 0
        %629 = vmatprep.subr.bf16.mxu0 %v609
        %630 = vmatpush1.bf16.msra.mxu0 %v608
        %631 = vmatprep.subr.bf16.mxu0 %v607
        %632 = vmatpush1.bf16.msra.mxu0 %v606
        %633 = vmatprep.subr.bf16.mxu0 %v605
        %634 = vmatpush1.bf16.msra.mxu0 %v604
        %635 = vmatprep.subr.bf16.mxu0 %v603
        %636 = vmatpush1.bf16.msra.mxu0 %v602
        %637 = vmatprep.subr.bf16.mxu0 0
        %638 = vmatpush2.bf16.msra.mxu0 0
        %639 = vmatprep.subr.bf16.mxu0 0
        %640 = vmatpush2.bf16.msra.mxu0 0
        %641 = vmatprep.subr.bf16.mxu0 0
        %642 = vmatpush2.bf16.msra.mxu0 0
        %643 = vmatprep.subr.bf16.mxu0 0
        %644 = vmatpush2.bf16.msra.mxu0 0
        %645 = vmatprep.subr.bf16.mxu0 0
        %646 = vmatpush2.bf16.msra.mxu0 0
        %647 = vmatprep.subr.bf16.mxu0 0
        %648 = vmatpush2.bf16.msra.mxu0 0
        %649 = vmatprep.subr.bf16.mxu0 0
        %650 = vmatpush2.bf16.msra.mxu0 0
        %651 = vmatprep.subr.bf16.mxu0 0
        %652 = vmatpush2.bf16.msra.mxu0 0
        %653 = vmatprep.mubr.bf16.mxu0 0
        %654 = vmatmul.mubr.bf16.gmra.mxu0 %v619
        %v655 = vpop.f32.mrf.mxu0
        %v656 = vadd.f32 %v572, %v655
        %v657 = vpop.f32.mrf.mxu0
        %v658 = vadd.f32 %v574, %v657
        %v659 = vpop.f32.mrf.mxu0
        %v660 = vpop.f32.mrf.mxu0
        %661 = vdwg.mxu0
        %v662 = vld [vmem:[%s225 + $0x4] sm:$0xf]
        %v663 = vmul.bf16 %v662, 1040203264
        %v664 = vld [vmem:[%s230 + $0x4] sm:$0xf]
        %v665 = vld [vmem:[%s235 + $0x4] sm:$0xf]
        %v667 = vsel %vm247, %v663, 0
        %v670 = vsel %vm247, %v664, 0
        %672 = vmatprep.subr.bf16.mxu0 0
        %673 = vmatpush1.bf16.xpose.msra.mxu0 0
        %674 = vmatprep.subr.bf16.mxu0 0
        %675 = vmatpush1.bf16.xpose.msra.mxu0 0
        %676 = vmatprep.subr.bf16.mxu0 0
        %677 = vmatpush1.bf16.xpose.msra.mxu0 0
        %678 = vmatprep.subr.bf16.mxu0 0
        %679 = vmatpush1.bf16.xpose.msra.mxu0 0
        %680 = vmatprep.subr.bf16.mxu0 0
        %681 = vmatpush1.bf16.xpose.msra.mxu0 0
        %682 = vmatprep.subr.bf16.mxu0 0
        %683 = vmatpush1.bf16.xpose.msra.mxu0 0
        %684 = vmatprep.subr.bf16.mxu0 0
        %685 = vmatpush1.bf16.xpose.msra.mxu0 0
        %686 = vmatprep.subr.bf16.mxu0 0
        %687 = vmatpush1.bf16.xpose.msra.mxu0 %v670
        %688 = vmatprep.subr.bf16.mxu0 0
        %689 = vmatpush2.bf16.xpose.msra.mxu0 0
        %690 = vmatprep.subr.bf16.mxu0 0
        %691 = vmatpush2.bf16.xpose.msra.mxu0 0
        %692 = vmatprep.subr.bf16.mxu0 0
        %693 = vmatpush2.bf16.xpose.msra.mxu0 0
        %694 = vmatprep.subr.bf16.mxu0 0
        %695 = vmatpush2.bf16.xpose.msra.mxu0 0
        %696 = vmatprep.subr.bf16.mxu0 0
        %697 = vmatpush2.bf16.xpose.msra.mxu0 0
        %698 = vmatprep.subr.bf16.mxu0 0
        %699 = vmatpush2.bf16.xpose.msra.mxu0 0
        %700 = vmatprep.subr.bf16.mxu0 0
        %701 = vmatpush2.bf16.xpose.msra.mxu0 0
        %702 = vmatprep.subr.bf16.mxu0 0
        %703 = vmatpush2.bf16.xpose.msra.mxu0 0
        %704 = vmatprep.mubr.bf16.mxu0 0
        %705 = vmatmul.mubr.bf16.gmra.mxu0 %v667
        %v706 = vpop.f32.mrf.mxu0
        %v707 = vadd.f32 0.0, %v706
        %v708 = vpop.f32.mrf.mxu0
        %v709 = vpop.f32.mrf.mxu0
        %v710 = vpop.f32.mrf.mxu0
        %711 = vdwg.mxu0
        %v712 = vsel %vm242, %v707, -1e+30
        %v713 = vsel %vm295, %v712, -inf
        %714 = vmax.xlane.f32.xlu0 %v713
        %v715 = vpop.xlane.xlu0 %714
        %v716 = vsub.f32 %v712, %v715
        %v717 = vmul.f32 %v716, 1.442695
        %v718 = vpow.pop %v717
        %v719 = vsel %vm295, %v718, 0.0
        %720 = vadd.xlane.f32.xlu0 %v719
        %v721 = vpop.xlane.xlu0 %720
        %v722 = vrcp.pop %v721
        %v723 = vmul.f32 %v718, %v722
        %v724 = vpack.c.bf16 %v723, %v723
        %v726 = vsel %vm295, %v724, 0
        %v729 = vsel %vm311, %v665, 0
        %731 = vmatprep.subr.bf16.mxu0 0
        %732 = vmatpush1.bf16.msra.mxu0 0
        %733 = vmatprep.subr.bf16.mxu0 0
        %734 = vmatpush1.bf16.msra.mxu0 0
        %735 = vmatprep.subr.bf16.mxu0 0
        %736 = vmatpush1.bf16.msra.mxu0 0
        %737 = vmatprep.subr.bf16.mxu0 0
        %738 = vmatpush1.bf16.msra.mxu0 0
        %739 = vmatprep.subr.bf16.mxu0 0
        %740 = vmatpush1.bf16.msra.mxu0 0
        %741 = vmatprep.subr.bf16.mxu0 0
        %742 = vmatpush1.bf16.msra.mxu0 0
        %743 = vmatprep.subr.bf16.mxu0 0
        %744 = vmatpush1.bf16.msra.mxu0 0
        %745 = vmatprep.subr.bf16.mxu0 0
        %746 = vmatpush1.bf16.msra.mxu0 %v729
        %747 = vmatprep.subr.bf16.mxu0 0
        %748 = vmatpush2.bf16.msra.mxu0 0
        %749 = vmatprep.subr.bf16.mxu0 0
        %750 = vmatpush2.bf16.msra.mxu0 0
        %751 = vmatprep.subr.bf16.mxu0 0
        %752 = vmatpush2.bf16.msra.mxu0 0
        %753 = vmatprep.subr.bf16.mxu0 0
        %754 = vmatpush2.bf16.msra.mxu0 0
        %755 = vmatprep.subr.bf16.mxu0 0
        %756 = vmatpush2.bf16.msra.mxu0 0
        %757 = vmatprep.subr.bf16.mxu0 0
        %758 = vmatpush2.bf16.msra.mxu0 0
        %759 = vmatprep.subr.bf16.mxu0 0
        %760 = vmatpush2.bf16.msra.mxu0 0
        %761 = vmatprep.subr.bf16.mxu0 0
        %762 = vmatpush2.bf16.msra.mxu0 0
        %763 = vmatprep.mubr.bf16.mxu0 0
        %764 = vmatmul.mubr.bf16.gmra.mxu0 %v726
        %v765 = vpop.f32.mrf.mxu0
        %v766 = vadd.f32 0.0, %v765
        %v767 = vpop.f32.mrf.mxu0
        %v768 = vpop.f32.mrf.mxu0
        %v769 = vpop.f32.mrf.mxu0
        %770 = vdwg.mxu0
        %v771 = vpack.c.bf16 %v766, %v766
        %s772 = scalar_lea.vmem %s3, 128
        %v773 = vld [vmem:[%s772] sm:$0xff]
        %v774 = vld [vmem:[%s772 + $0x8] sm:$0xff]
        %v775 = vld [vmem:[%s772 + $0x10] sm:$0xff]
        %v776 = vld [vmem:[%s772 + $0x18] sm:$0xff]
        %v777 = vld [vmem:[%s772 + $0x20] sm:$0xff]
        %v778 = vld [vmem:[%s772 + $0x28] sm:$0xff]
        %v779 = vld [vmem:[%s772 + $0x30] sm:$0xff]
        %v780 = vld [vmem:[%s772 + $0x38] sm:$0xff]
        %v789 = vunpack.c.l.b16 %v773
        %v790 = vunpack.c.h.b16 %v773
        %v791 = vunpack.c.l.b16 %v774
        %v792 = vunpack.c.h.b16 %v774
        %v793 = vunpack.c.l.b16 %v775
        %v794 = vunpack.c.h.b16 %v775
        %v795 = vunpack.c.l.b16 %v776
        %v796 = vunpack.c.h.b16 %v776
        %v797 = vunpack.c.l.b16 %v777
        %v798 = vunpack.c.h.b16 %v777
        %v799 = vunpack.c.l.b16 %v778
        %v800 = vunpack.c.h.b16 %v778
        %v801 = vunpack.c.l.b16 %v779
        %v802 = vunpack.c.h.b16 %v779
        %v803 = vunpack.c.l.b16 %v780
        %v804 = vunpack.c.h.b16 %v780
        %v805 = vpack.c.b16 %v791, %v789
        %v806 = vpack.c.b16 %v792, %v790
        %v807 = vpack.c.b16 %v795, %v793
        %v808 = vpack.c.b16 %v796, %v794
        %v809 = vpack.c.b16 %v799, %v797
        %v810 = vpack.c.b16 %v800, %v798
        %v811 = vpack.c.b16 %v803, %v801
        %v812 = vpack.c.b16 %v804, %v802
        %v822 = vsel %vm247, %v771, 0
        %824 = vmatprep.subr.bf16.mxu0 0
        %825 = vmatpush1.bf16.msra.mxu0 0
        %826 = vmatprep.subr.bf16.mxu0 0
        %827 = vmatpush1.bf16.msra.mxu0 0
        %828 = vmatprep.subr.bf16.mxu0 0
        %829 = vmatpush1.bf16.msra.mxu0 0
        %830 = vmatprep.subr.bf16.mxu0 0
        %831 = vmatpush1.bf16.msra.mxu0 0
        %832 = vmatprep.subr.bf16.mxu0 %v812
        %833 = vmatpush1.bf16.msra.mxu0 %v811
        %834 = vmatprep.subr.bf16.mxu0 %v810
        %835 = vmatpush1.bf16.msra.mxu0 %v809
        %836 = vmatprep.subr.bf16.mxu0 %v808
        %837 = vmatpush1.bf16.msra.mxu0 %v807
        %838 = vmatprep.subr.bf16.mxu0 %v806
        %839 = vmatpush1.bf16.msra.mxu0 %v805
        %840 = vmatprep.subr.bf16.mxu0 0
        %841 = vmatpush2.bf16.msra.mxu0 0
        %842 = vmatprep.subr.bf16.mxu0 0
        %843 = vmatpush2.bf16.msra.mxu0 0
        %844 = vmatprep.subr.bf16.mxu0 0
        %845 = vmatpush2.bf16.msra.mxu0 0
        %846 = vmatprep.subr.bf16.mxu0 0
        %847 = vmatpush2.bf16.msra.mxu0 0
        %848 = vmatprep.subr.bf16.mxu0 0
        %849 = vmatpush2.bf16.msra.mxu0 0
        %850 = vmatprep.subr.bf16.mxu0 0
        %851 = vmatpush2.bf16.msra.mxu0 0
        %852 = vmatprep.subr.bf16.mxu0 0
        %853 = vmatpush2.bf16.msra.mxu0 0
        %854 = vmatprep.subr.bf16.mxu0 0
        %855 = vmatpush2.bf16.msra.mxu0 0
        %856 = vmatprep.mubr.bf16.mxu0 0
        %857 = vmatmul.mubr.bf16.gmra.mxu0 %v822
        %v858 = vpop.f32.mrf.mxu0
        %v859 = vadd.f32 0.0, %v858
        %v860 = vpop.f32.mrf.mxu0
        %v861 = vadd.f32 0.0, %v860
        %v862 = vpop.f32.mrf.mxu0
        %v863 = vpop.f32.mrf.mxu0
        %864 = vdwg.mxu0
        %v865 = vadd.f32 %v656, %v859
        %v866 = vadd.f32 %v658, %v861
        %867 = vst [vmem:[%s220] sm:$0xff] %v865
        %868 = vst.msk [vmem:[%s220 + $0x8] sm:$0xff] %vm247, %v866
        %s869 = sand.u32 %s125, 1
        %s870 = scalar_lea.sflag [#allocation3], %s869
        %s871 = sand.u32 %s125, 1
        %s872 = smul.addr %s871, 16
        %s873 = scalar_lea.vmem [#allocation2], %s872
        // Predicated region
        $region37: #{causal_self_attention.3} parent=35 // pred_check
          %p874 = pneg %p135
        $region38: #{causal_self_attention.3} parent=35 // pred_check_branch
          %876 = sbr.rel (%p874) target = $region40
        $region39: #{causal_self_attention.3} parent=35 // pred_region
          %s878 = ssub.s32 256, 256
          %879 = vsyncadd %s870, %s878
          %s880 = smul.addr %s18, 2
          %s881 = smul.addr %s880, 128
          %s882 = scalar_lea.hbm %s4, %s881
          %s884 = sshll.u32 %s873, 4
          %s885 = int_to_ptr.vmem [resolvable:$true] %s884
          %887 = dma.vmem_to_hbm [thread:$0]  %s885, 256, %s882, %s870
        $region40: #{causal_self_attention.3} parent=35 // pred_fallthru
          _
      $region36: #{causal_self_attention.3} parent=5 // pred_fallthru
        _
      %p888 = scmp.le.s32.totalorder 2, %s13
      // Predicated region
      $region41: #{causal_self_attention.3} parent=5 // pred_check
        %p889 = pneg %p888
      $region42: #{causal_self_attention.3} parent=5 // pred_check_branch
        %891 = sbr.rel (%p889) target = $region44
      $region43: #{causal_self_attention.3} parent=5 // pred_region
        %s892 = ssub.s32 %s13, 2
        // Predicated region
        $region45: #{causal_self_attention.3} parent=43 // pred_check
          %p893 = pneg %p141
        $region46: #{causal_self_attention.3} parent=43 // pred_check_branch
          %895 = sbr.rel (%p893) target = $region48
        $region47: #{causal_self_attention.3} parent=43 // pred_region
          %s896 = sand.u32 %s126, 1
          %s897 = scalar_lea.sflag [#allocation3], %s896
          %s898 = sand.u32 %s126, 1
          %s899 = smul.addr %s898, 16
          %s900 = scalar_lea.vmem [#allocation2], %s899
          %901 = dma.done %s897, 256
        $region48: #{causal_self_attention.3} parent=43 // pred_fallthru
          _
      $region44: #{causal_self_attention.3} parent=5 // pred_fallthru
        _
    $region6: #{causal_self_attention.3} parent=1 // loop_footer
      %s17 = sadd.s32 1, %s13
    $region7: #{causal_self_attention.3} parent=1 // loop_footer_branch
      %12 = sbr.rel target = $region3
    $region8: #{causal_self_attention.3} parent=1 // loop_exit
      _
    %902 = vsyncpa [#allocation3], 1
    %s903 = scalar_lea.sflag [#allocation3], 1
    %904 = vsyncpa %s903, 1

</llo_original>
